<compile_context>
chip_gen: v7x
topology: tpu7x:2x2x1
jax: 0.10.0
libtpu: 0.0.40
codegen_flags: <defaults>
</compile_context>

<pallas_src>
import functools

import jax
import jax.numpy as jnp
from jax.experimental import pallas as pl
from jax.experimental.pallas import tpu as pltpu


LANES = 128
SUBLANES = 8
NEG_INF = -1e30


def _round_up(x, m):
    return (x + m - 1) // m * m


def _cdiv(a, b):
    return -(-a // b)


# -----------------------------------------------------------------------------
# Fused Pallas kernel: conv matmul + ReLU + GAP + fc head + softmax
# -----------------------------------------------------------------------------
def _fused_cnn_kernel(p_ref, pool_ref, wc_ref, bc_ref, w1_ref, b1_ref,
                      w2_ref, b2_ref, o_ref, pscr_ref, acc_ref, *, inv_hw, pk):
    """One grid step = one row tile of im2col patches of one image group.

    p_ref   : (row_tile, pk)       bf16 im2col patches (natural width, pk=9*Cin)
    pool_ref: (1, 8, row_tile)     bf16 pooling matrix (1.0 where the row
                                   belongs to sublane-i's image of this group)
    wc_ref  : (k_pad, F_pad)       bf16 conv weight (K zero-padded to 128)
    bc_ref  : (1, F_pad)           f32  conv bias (zero padded)
    w1_ref  : (F_pad, HID)         bf16 fc1 weight
    b1_ref  : (1, HID)             f32  fc1 bias
    w2_ref  : (HID, C_pad)         bf16 fc2 weight
    b2_ref  : (1, C_pad)           f32  fc2 bias (padded classes = -1e30)
    o_ref   : (8, C_pad)           f32  softmax probabilities for this group
    pscr_ref: (row_tile, k_pad)    bf16 VMEM scratch (lane-padded patch block)
    acc_ref : (8, F_pad)           f32  pooled-feature accumulator (VMEM)
    """
    r = pl.program_id(1)

    @pl.when(r == 0)
    def _init():
        acc_ref[...] = jnp.zeros_like(acc_ref)
        # Zero once per group so lanes [pk:128) of the patch scratch stay zero.
        pscr_ref[...] = jnp.zeros_like(pscr_ref)

    # Lane-pad the raw (row_tile, 9*Cin) patch block into the 128-lane scratch.
    pscr_ref[:, :pk] = p_ref[...]

    # --- conv as matmul (bf16 operands, f32 accumulate) + bias + ReLU --------
    y = jnp.dot(pscr_ref[...], wc_ref[...], preferred_element_type=jnp.float32)
    y = jnp.maximum(y + bc_ref[...], 0.0)               # (row_tile, F_pad) f32

    # --- global average pool: precomputed bf16 pool matrix, bf16 activations -
    acc_ref[...] += jnp.dot(pool_ref[0], y.astype(jnp.bfloat16),
                            preferred_element_type=jnp.float32)

    # --- fc head + softmax: only once per group (last row tile) --------------
    @pl.when(r == pl.num_programs(1) - 1)
    def _head():
        feats = acc_ref[...] * inv_hw                   # exact 1/HW scale, f32
        h = jnp.dot(feats.astype(jnp.bfloat16), w1_ref[...],
                    preferred_element_type=jnp.float32)
        h = jnp.maximum(h + b1_ref[...], 0.0)
        # TODO(synk): Dropout(0.2) omitted -- identity under eval()/inference.
        logits = jnp.dot(h.astype(jnp.bfloat16), w2_ref[...],
                         preferred_element_type=jnp.float32) + b2_ref[...]
        m = jnp.max(logits, axis=-1, keepdims=True)
        e = jnp.exp(logits - m)                         # padded classes -> 0
        o_ref[...] = e / jnp.sum(e, axis=-1, keepdims=True)   # exact divide


# -----------------------------------------------------------------------------
# Wrapper glue (plain JAX, outside the hot loop)
# -----------------------------------------------------------------------------
def _im2col_3x3_pad1(x_nchw):
    """NCHW -> (B*H*W, 9*Cin) im2col rows, feature order (kh, kw, cin)."""
    B, Cin, H, W = x_nchw.shape
    x = jnp.transpose(x_nchw, (0, 2, 3, 1))                       # NHWC
    x = jnp.pad(x, ((0, 0), (1, 1), (1, 1), (0, 0)))              # spatial pad
    taps = [x[:, kh:kh + H, kw:kw + W, :]
            for kh in range(3) for kw in range(3)]
    p = jnp.concatenate(taps, axis=-1)                            # (B, H, W, 9*Cin)
    return p.reshape(B * H * W, 9 * Cin)


@jax.jit
def cnn_forward(x, params):
    """Full CNN.forward: base_model(x) -> reshape -> fc head (eval semantics)."""
    B, Cin, H, W = x.shape
    conv_w, conv_b = params["conv_w"], params["conv_b"]
    w1, b1, w2, b2 = params["w1"], params["b1"], params["w2"], params["b2"]
    Cout = conv_w.shape[0]
    hidden = w1.shape[1]
    C = w2.shape[1]

    hw = H * W
    pk = 9 * Cin
    k_pad = _round_up(pk, LANES)
    f_pad = _round_up(Cout, LANES)
    c_pad = _round_up(C, LANES)
    assert hidden % LANES == 0

    # Adaptive group size: <=8 images per group, but split small batches into
    # >=2 groups so the megacore-parallel axis keeps both v7x TCs busy.
    gi = min(SUBLANES, _cdiv(B, 2))
    n_groups = _cdiv(B, gi)

    # Row tiling: big tiles (up to 2048 rows), tail-padded to a tile multiple.
    rows_pg = gi * hw
    row_tile = min(2048, _round_up(rows_pg, SUBLANES))
    tiles_per_group = _cdiv(rows_pg, row_tile)
    rows_pg_padded = tiles_per_group * row_tile

    # --- patch stream: natural 9*Cin width, bf16, real images only -----------
    patches = _im2col_3x3_pad1(x).astype(jnp.bfloat16)            # (B*hw, pk)
    n_imgs_slots = n_groups * gi
    # TODO(synk): for B % gi != 0 the ragged tail group still carries zero rows
    #             for its missing images; a prefetched per-group row count
    #             could skip them entirely.
    patches = jnp.pad(patches, ((0, (n_imgs_slots - B) * hw), (0, 0)))
    patches = patches.reshape(n_groups, gi * hw, pk)
    patches = jnp.pad(patches, ((0, 0), (0, rows_pg_padded - gi * hw), (0, 0)))
    patches = patches.reshape(n_groups * rows_pg_padded, pk)

    # --- precomputed bf16 pooling matrix, shared across groups ---------------
    rr = jnp.arange(rows_pg_padded)
    img = rr // hw                                                # image within group
    sub = jnp.arange(SUBLANES)
    pool = ((img[None, :] == sub[:, None]) & (sub[:, None] < gi))
    pool = pool.astype(jnp.bfloat16)
    pool = pool.reshape(SUBLANES, tiles_per_group, row_tile).transpose(1, 0, 2)

    # --- weights: conv weight in (kh, kw, cin) tap order, zero padded, bf16 --
    wc = conv_w.transpose(2, 3, 1, 0).reshape(pk, Cout)
    wc = jnp.pad(wc, ((0, k_pad - pk), (0, f_pad - Cout))).astype(jnp.bfloat16)
    bc = jnp.pad(conv_b, (0, f_pad - Cout)).reshape(1, f_pad).astype(jnp.float32)

    w1p = jnp.pad(w1, ((0, f_pad - Cout), (0, 0))).astype(jnp.bfloat16)
    b1p = b1.reshape(1, hidden).astype(jnp.float32)
    w2p = jnp.pad(w2, ((0, 0), (0, c_pad - C))).astype(jnp.bfloat16)
    b2p = jnp.pad(b2, (0, c_pad - C), constant_values=NEG_INF)    # mask padded classes
    b2p = b2p.reshape(1, c_pad).astype(jnp.float32)

    kernel = functools.partial(_fused_cnn_kernel, inv_hw=1.0 / hw, pk=pk)

    def full(shape):
        return pl.BlockSpec(shape, lambda g, r: (0,) * len(shape))

    out = pl.pallas_call(
        kernel,
        out_shape=jax.ShapeDtypeStruct((n_groups * SUBLANES, c_pad), jnp.float32),
        grid_spec=pltpu.PrefetchScalarGridSpec(
            num_scalar_prefetch=0,
            grid=(n_groups, tiles_per_group),
            in_specs=[
                pl.BlockSpec((row_tile, pk),
                             lambda g, r: (g * tiles_per_group + r, 0)),
                pl.BlockSpec((1, SUBLANES, row_tile), lambda g, r: (r, 0, 0)),
                full((k_pad, f_pad)),
                full((1, f_pad)),
                full((f_pad, hidden)),
                full((1, hidden)),
                full((hidden, c_pad)),
                full((1, c_pad)),
            ],
            out_specs=pl.BlockSpec((SUBLANES, c_pad), lambda g, r: (g, 0)),
            scratch_shapes=[
                pltpu.VMEM((row_tile, k_pad), jnp.bfloat16),   # lane-padded patches
                pltpu.VMEM((SUBLANES, f_pad), jnp.float32),    # pooled-feature acc
            ],
        ),
        compiler_params=pltpu.CompilerParams(
            dimension_semantics=("parallel", "arbitrary"),
            vmem_limit_bytes=32 * 1024 * 1024,
        ),
    )(patches, pool, wc, bc, w1p, b1p, w2p, b2p)

    # Group g / sublane i  ->  image g*gi + i ; drop padding sublanes/classes.
    out = out.reshape(n_groups, SUBLANES, c_pad)[:, :gi].reshape(n_groups * gi, c_pad)
    return out[:B, :C]


# -----------------------------------------------------------------------------
# Pure-JAX reference (for correctness check only)
# -----------------------------------------------------------------------------
def _reference_forward(x, params):
    conv = jax.lax.conv_general_dilated(
        x, params["conv_w"], window_strides=(1, 1), padding="SAME",
        dimension_numbers=("NCHW", "OIHW", "NCHW"))
    conv = jax.nn.relu(conv + params["conv_b"][None, :, None, None])
    feats = conv.mean(axis=(2, 3))                                # GAP -> (B, Cout)
    h = jax.nn.relu(feats @ params["w1"] + params["b1"])
    logits = h @ params["w2"] + params["b2"]
    return jax.nn.softmax(logits, axis=1)


def init_params(key, *, cin=4, cout=32, hidden=1024, num_classes=10):
    ks = jax.random.split(key, 6)
    scale = 0.05
    return {
        "conv_w": scale * jax.random.normal(ks[0], (cout, cin, 3, 3), jnp.float32),
        "conv_b": scale * jax.random.normal(ks[1], (cout,), jnp.float32),
        "w1":     scale * jax.random.normal(ks[2], (cout, hidden), jnp.float32),
        "b1":     scale * jax.random.normal(ks[3], (hidden,), jnp.float32),
        "w2":     scale * jax.random.normal(ks[4], (hidden, num_classes), jnp.float32),
        "b2":     scale * jax.random.normal(ks[5], (num_classes,), jnp.float32),
    }


if __name__ == "__main__":
    key = jax.random.PRNGKey(0)
    k_x, k_p = jax.random.split(key)

    B, Cin, H, W = 2, 4, 16, 16
    num_classes = 10

    x = jax.random.normal(k_x, (B, Cin, H, W), jnp.float32)        # NCHW
    params = init_params(k_p, cin=Cin, cout=32, hidden=1024,
                         num_classes=num_classes)

    probs = cnn_forward(x, params)
    probs = jax.block_until_ready(probs)

    assert probs.shape == (B, num_classes)
    row_sums = jnp.sum(probs, axis=1)                              # exact softmax divide
    assert bool(jnp.all(jnp.abs(row_sums - 1.0) < 1e-3)), "softmax rows must sum to 1"

    # Compare against a pure-JAX f32 reference (bf16 matmul operands in-kernel).
    ref = _reference_forward(x, params)
    assert bool(jnp.all(jnp.abs(probs - ref) < 2.5e-2)), "mismatch vs reference"

    print("KERNEL_OK")
</pallas_src>

<mosaic_0001>
module attributes {stable_mosaic.version = 11 : i64} {
  func.func @_fused_cnn_kernel(%arg0: i32, %arg1: i32, %arg2: memref<256x36xbf16, #tpu.memory_space<vmem>>, %arg3: memref<1x8x256xbf16, #tpu.memory_space<vmem>>, %arg4: memref<128x128xbf16, #tpu.memory_space<vmem>>, %arg5: memref<1x128xf32, #tpu.memory_space<vmem>>, %arg6: memref<128x1024xbf16, #tpu.memory_space<vmem>>, %arg7: memref<1x1024xf32, #tpu.memory_space<vmem>>, %arg8: memref<1024x128xbf16, #tpu.memory_space<vmem>>, %arg9: memref<1x128xf32, #tpu.memory_space<vmem>>, %arg10: memref<8x128xf32, #tpu.memory_space<vmem>>, %arg11: memref<256x128xbf16, #tpu.memory_space<vmem>>, %arg12: memref<8x128xf32, #tpu.memory_space<vmem>>) attributes {dimension_semantics = [#tpu.dimension_semantics<parallel>, #tpu.dimension_semantics<arbitrary>], iteration_bounds = array<i64: 2, 1>, scalar_prefetch = 0 : i64, scratch_operands = 2 : i64, tpu.core_type = #tpu.core_type<tc>, window_params = [{transform_indices = @transform_0, window_bounds = array<i64: 256, 36>}, {transform_indices = @transform_1, window_bounds = array<i64: 1, 8, 256>}, {pipeline_mode = #tpu.pipeline_mode<synchronous>, transform_indices = @transform_2, window_bounds = array<i64: 128, 128>}, {pipeline_mode = #tpu.pipeline_mode<synchronous>, transform_indices = @transform_3, window_bounds = array<i64: 1, 128>}, {pipeline_mode = #tpu.pipeline_mode<synchronous>, transform_indices = @transform_4, window_bounds = array<i64: 128, 1024>}, {pipeline_mode = #tpu.pipeline_mode<synchronous>, transform_indices = @transform_5, window_bounds = array<i64: 1, 1024>}, {pipeline_mode = #tpu.pipeline_mode<synchronous>, transform_indices = @transform_6, window_bounds = array<i64: 1024, 128>}, {pipeline_mode = #tpu.pipeline_mode<synchronous>, transform_indices = @transform_7, window_bounds = array<i64: 1, 128>}, {transform_indices = @transform_8, window_bounds = array<i64: 8, 128>}]} {
    %c0_i32 = arith.constant 0 : i32
    %0 = arith.cmpi eq, %arg1, %c0_i32 : i32
    %1 = arith.extui %0 : i1 to i32
    %c0_i32_0 = arith.constant 0 : i32
    %2 = arith.cmpi ne, %1, %c0_i32_0 : i32
    scf.if %2 {
      %cst_21 = arith.constant 0.000000e+00 : f32
      %23 = vector.broadcast %cst_21 : f32 to vector<8x128xf32>
      %c0_22 = arith.constant 0 : index
      %c0_23 = arith.constant 0 : index
      %24 = vector.load %arg12[%c0_22, %c0_23] : memref<8x128xf32, #tpu.memory_space<vmem>>, vector<8x128xf32>
      tpu.vector_store %arg12[%c0_22, %c0_23], %23 {strides = array<i32>} : memref<8x128xf32, #tpu.memory_space<vmem>>, vector<8x128xf32>,
      %cst_24 = arith.constant 0.000000e+00 : bf16
      %25 = vector.broadcast %cst_24 : bf16 to vector<256x128xbf16>
      %c0_25 = arith.constant 0 : index
      %c0_26 = arith.constant 0 : index
      %26 = vector.load %arg11[%c0_25, %c0_26] : memref<256x128xbf16, #tpu.memory_space<vmem>>, vector<256x128xbf16>
      tpu.vector_store %arg11[%c0_25, %c0_26], %25 {strides = array<i32>} : memref<256x128xbf16, #tpu.memory_space<vmem>>, vector<256x128xbf16>,
    } else {
    }
    %c0 = arith.constant 0 : index
    %c0_1 = arith.constant 0 : index
    %3 = vector.load %arg2[%c0, %c0_1] : memref<256x36xbf16, #tpu.memory_space<vmem>>, vector<256x36xbf16>
    %c0_2 = arith.constant 0 : index
    %c0_3 = arith.constant 0 : index
    %4 = vector.load %arg11[%c0_2, %c0_3] : memref<256x128xbf16, #tpu.memory_space<vmem>>, vector<256x36xbf16>
    tpu.vector_store %arg11[%c0_2, %c0_3], %3 {strides = array<i32>} : memref<256x128xbf16, #tpu.memory_space<vmem>>, vector<256x36xbf16>,
    %c0_4 = arith.constant 0 : index
    %c0_5 = arith.constant 0 : index
    %5 = vector.load %arg11[%c0_4, %c0_5] : memref<256x128xbf16, #tpu.memory_space<vmem>>, vector<256x128xbf16>
    %c0_6 = arith.constant 0 : index
    %c0_7 = arith.constant 0 : index
    %6 = vector.load %arg4[%c0_6, %c0_7] : memref<128x128xbf16, #tpu.memory_space<vmem>>, vector<128x128xbf16>
    %cst = arith.constant dense<0.000000e+00> : vector<256x128xf32>
    %7 = tpu.matmul %5, %6, %cst {dimension_numbers = #tpu.dot_dimension_numbers<[1], [0], [0], [1], [0, 0, 1, 1], [], []>} : vector<256x128xbf16>, vector<128x128xbf16>, vector<256x128xf32> -> vector<256x128xf32>
    %c0_8 = arith.constant 0 : index
    %c0_9 = arith.constant 0 : index
    %8 = vector.load %arg5[%c0_8, %c0_9] : memref<1x128xf32, #tpu.memory_space<vmem>>, vector<1x128xf32>
    %9 = vector.broadcast %8 : vector<1x128xf32> to vector<256x128xf32>
    %10 = arith.addf %7, %9 : vector<256x128xf32>
    %cst_10 = arith.constant 0.000000e+00 : f32
    %11 = vector.broadcast %cst_10 : f32 to vector<256x128xf32>
    %12 = arith.maximumf %10, %11 : vector<256x128xf32>
    %c0_11 = arith.constant 0 : index
    %c0_12 = arith.constant 0 : index
    %13 = vector.load %arg12[%c0_11, %c0_12] : memref<8x128xf32, #tpu.memory_space<vmem>>, vector<8x128xf32>
    %c0_13 = arith.constant 0 : index
    %c0_14 = arith.constant 0 : index
    %c0_15 = arith.constant 0 : index
    %14 = vector.load %arg3[%c0_13, %c0_14, %c0_15] : memref<1x8x256xbf16, #tpu.memory_space<vmem>>, vector<1x8x256xbf16>
    %15 = vector.shape_cast %14 : vector<1x8x256xbf16> to vector<8x256xbf16>
    %16 = arith.truncf %12 : vector<256x128xf32> to vector<256x128xbf16>
    %cst_16 = arith.constant dense<0.000000e+00> : vector<8x128xf32>
    %17 = tpu.matmul %15, %16, %cst_16 {dimension_numbers = #tpu.dot_dimension_numbers<[1], [0], [0], [1], [0, 0, 1, 1], [], []>} : vector<8x256xbf16>, vector<256x128xbf16>, vector<8x128xf32> -> vector<8x128xf32>
    %18 = arith.addf %13, %17 : vector<8x128xf32>
    %c0_17 = arith.constant 0 : index
    %c0_18 = arith.constant 0 : index
    %19 = vector.load %arg12[%c0_17, %c0_18] : memref<8x128xf32, #tpu.memory_space<vmem>>, vector<8x128xf32>
    tpu.vector_store %arg12[%c0_17, %c0_18], %18 {strides = array<i32>} : memref<8x128xf32, #tpu.memory_space<vmem>>, vector<8x128xf32>,
    %c0_i32_19 = arith.constant 0 : i32
    %20 = arith.cmpi eq, %arg1, %c0_i32_19 : i32
    %21 = arith.extui %20 : i1 to i32
    %c0_i32_20 = arith.constant 0 : i32
    %22 = arith.cmpi ne, %21, %c0_i32_20 : i32
    scf.if %22 {
      %c0_21 = arith.constant 0 : index
      %c0_22 = arith.constant 0 : index
      %23 = vector.load %arg12[%c0_21, %c0_22] : memref<8x128xf32, #tpu.memory_space<vmem>>, vector<8x128xf32>
      %cst_23 = arith.constant 3.906250e-03 : f32
      %24 = vector.broadcast %cst_23 : f32 to vector<8x128xf32>
      %25 = arith.mulf %23, %24 : vector<8x128xf32>
      %26 = arith.truncf %25 : vector<8x128xf32> to vector<8x128xbf16>
      %c0_24 = arith.constant 0 : index
      %c0_25 = arith.constant 0 : index
      %27 = vector.load %arg6[%c0_24, %c0_25] : memref<128x1024xbf16, #tpu.memory_space<vmem>>, vector<128x1024xbf16>
      %cst_26 = arith.constant dense<0.000000e+00> : vector<8x1024xf32>
      %28 = tpu.matmul %26, %27, %cst_26 {dimension_numbers = #tpu.dot_dimension_numbers<[1], [0], [0], [1], [0, 0, 1, 1], [], []>} : vector<8x128xbf16>, vector<128x1024xbf16>, vector<8x1024xf32> -> vector<8x1024xf32>
      %c0_27 = arith.constant 0 : index
      %c0_28 = arith.constant 0 : index
      %29 = vector.load %arg7[%c0_27, %c0_28] : memref<1x1024xf32, #tpu.memory_space<vmem>>, vector<1x1024xf32>
      %30 = vector.broadcast %29 : vector<1x1024xf32> to vector<8x1024xf32>
      %31 = arith.addf %28, %30 : vector<8x1024xf32>
      %cst_29 = arith.constant 0.000000e+00 : f32
      %32 = vector.broadcast %cst_29 : f32 to vector<8x1024xf32>
      %33 = arith.maximumf %31, %32 : vector<8x1024xf32>
      %34 = arith.truncf %33 : vector<8x1024xf32> to vector<8x1024xbf16>
      %c0_30 = arith.constant 0 : index
      %c0_31 = arith.constant 0 : index
      %35 = vector.load %arg8[%c0_30, %c0_31] : memref<1024x128xbf16, #tpu.memory_space<vmem>>, vector<1024x128xbf16>
      %cst_32 = arith.constant dense<0.000000e+00> : vector<8x128xf32>
      %36 = tpu.matmul %34, %35, %cst_32 {dimension_numbers = #tpu.dot_dimension_numbers<[1], [0], [0], [1], [0, 0, 1, 1], [], []>} : vector<8x1024xbf16>, vector<1024x128xbf16>, vector<8x128xf32> -> vector<8x128xf32>
      %c0_33 = arith.constant 0 : index
      %c0_34 = arith.constant 0 : index
      %37 = vector.load %arg9[%c0_33, %c0_34] : memref<1x128xf32, #tpu.memory_space<vmem>>, vector<1x128xf32>
      %38 = vector.broadcast %37 : vector<1x128xf32> to vector<8x128xf32>
      %39 = arith.addf %36, %38 : vector<8x128xf32>
      %cst_35 = arith.constant dense<0xFF800000> : vector<8xf32>
      %40 = vector.multi_reduction <maximumf>, %39, %cst_35 [1] : vector<8x128xf32> to vector<8xf32>
      %41 = vector.shape_cast %40 : vector<8xf32> to vector<8x1xf32>
      %42 = vector.broadcast %41 : vector<8x1xf32> to vector<8x128xf32>
      %43 = arith.subf %39, %42 : vector<8x128xf32>
      %44 = math.exp %43 : vector<8x128xf32>
      %cst_36 = arith.constant dense<0.000000e+00> : vector<8xf32>
      %45 = vector.multi_reduction <add>, %44, %cst_36 [1] : vector<8x128xf32> to vector<8xf32>
      %46 = vector.shape_cast %45 : vector<8xf32> to vector<8x1xf32>
      %47 = vector.broadcast %46 : vector<8x1xf32> to vector<8x128xf32>
      %48 = arith.divf %44, %47 : vector<8x128xf32>
      %c0_37 = arith.constant 0 : index
      %c0_38 = arith.constant 0 : index
      %49 = vector.load %arg10[%c0_37, %c0_38] : memref<8x128xf32, #tpu.memory_space<vmem>>, vector<8x128xf32>
      tpu.vector_store %arg10[%c0_37, %c0_38], %48 {strides = array<i32>} : memref<8x128xf32, #tpu.memory_space<vmem>>, vector<8x128xf32>,
    } else {
    }
    return
  }
  func.func @transform_0(%arg0: i32, %arg1: i32) -> (i32, i32) {
    %c1_i32 = arith.constant 1 : i32
    %0 = arith.muli %arg0, %c1_i32 : i32
    %1 = arith.addi %0, %arg1 : i32
    %c0_i32 = arith.constant 0 : i32
    %c0_i32_0 = arith.constant 0 : i32
    return %1, %c0_i32 : i32, i32
  }
  func.func @transform_1(%arg0: i32, %arg1: i32) -> (i32, i32, i32) {
    %c0_i32 = arith.constant 0 : i32
    %c0_i32_0 = arith.constant 0 : i32
    %c0_i32_1 = arith.constant 0 : i32
    return %arg1, %c0_i32, %c0_i32_0 : i32, i32, i32
  }
  func.func @transform_2(%arg0: i32, %arg1: i32) -> (i32, i32) {
    %c0_i32 = arith.constant 0 : i32
    %c0_i32_0 = arith.constant 0 : i32
    %c0_i32_1 = arith.constant 0 : i32
    return %c0_i32, %c0_i32_0 : i32, i32
  }
  func.func @transform_3(%arg0: i32, %arg1: i32) -> (i32, i32) {
    %c0_i32 = arith.constant 0 : i32
    %c0_i32_0 = arith.constant 0 : i32
    %c0_i32_1 = arith.constant 0 : i32
    return %c0_i32, %c0_i32_0 : i32, i32
  }
  func.func @transform_4(%arg0: i32, %arg1: i32) -> (i32, i32) {
    %c0_i32 = arith.constant 0 : i32
    %c0_i32_0 = arith.constant 0 : i32
    %c0_i32_1 = arith.constant 0 : i32
    return %c0_i32, %c0_i32_0 : i32, i32
  }
  func.func @transform_5(%arg0: i32, %arg1: i32) -> (i32, i32) {
    %c0_i32 = arith.constant 0 : i32
    %c0_i32_0 = arith.constant 0 : i32
    %c0_i32_1 = arith.constant 0 : i32
    return %c0_i32, %c0_i32_0 : i32, i32
  }
  func.func @transform_6(%arg0: i32, %arg1: i32) -> (i32, i32) {
    %c0_i32 = arith.constant 0 : i32
    %c0_i32_0 = arith.constant 0 : i32
    %c0_i32_1 = arith.constant 0 : i32
    return %c0_i32, %c0_i32_0 : i32, i32
  }
  func.func @transform_7(%arg0: i32, %arg1: i32) -> (i32, i32) {
    %c0_i32 = arith.constant 0 : i32
    %c0_i32_0 = arith.constant 0 : i32
    %c0_i32_1 = arith.constant 0 : i32
    return %c0_i32, %c0_i32_0 : i32, i32
  }
  func.func @transform_8(%arg0: i32, %arg1: i32) -> (i32, i32) {
    %c0_i32 = arith.constant 0 : i32
    %c0_i32_0 = arith.constant 0 : i32
    return %arg0, %c0_i32 : i32, i32
  }
}

</mosaic_0001>

<llo_original>
// kernel: cnn_forward.1
$region0: #{cnn_forward.1}
  #allocation0 [shape = 'u32[]', space=smem, size = 0x4, offset = 0x4, fixed_abs, tag = 'smem constant byte address 0x4 - core index']
  #allocation1 [shape = 'u32[144,128]{1,0:T(1,128)}', space=vmem, size = 0x12000, scoped, tag = 'internal scratch']
  #allocation2 [shape = 'bf16[256,128]{1,0:T(16,128)(2,1)}', space=vmem, size = 0x10000, scoped, tag = 'scratch operand']
  #allocation3 [shape = 'f32[8,128]{1,0:T(8,128)}', space=vmem, size = 0x1000, scoped, tag = 'scratch operand']
  %s0 = inlined_call_operand.vmem [shape: bf16[512,36], index: 0, kind: input, shape index: {}]
  %s1 = inlined_call_operand.vmem [shape: bf16[1,8,256], index: 1, kind: input, shape index: {}]
  %s2 = inlined_call_operand.vmem [shape: bf16[128,128], index: 2, kind: input, shape index: {}]
  %s3 = inlined_call_operand.vmem [shape: f32[1,128], index: 3, kind: input, shape index: {}]
  %s4 = inlined_call_operand.vmem [shape: bf16[128,1024], index: 4, kind: input, shape index: {}]
  %s5 = inlined_call_operand.vmem [shape: f32[1,1024], index: 5, kind: input, shape index: {}]
  %s6 = inlined_call_operand.vmem [shape: bf16[1024,128], index: 6, kind: input, shape index: {}]
  %s7 = inlined_call_operand.vmem [shape: f32[1,128], index: 7, kind: input, shape index: {}]
  %s8 = inlined_call_operand.vmem [shape: f32[16,128], index: 8, kind: output, shape index: {}]
  %s9 = sld [smem:[#allocation0]]
  $region73: #{cnn_forward.1} parent=0
    _
  %s11 = ssub.s32 1, %s9
  %s12 = scalar_select 0, %s11, %s9
  loop: start=0, step=1, limit=4
  $region2: #{cnn_forward.1} parent=0 // loop_pre_header
    _
  $region3: #{cnn_forward.1} parent=0 // loop_header
    %s14 = sphi 0, %s18
    %p15 = scmp.ge.s32.totalorder %s14, 4
    %s21 = sphi 0, %s33
    %s22 = sphi 0, %s29
    %s23 = sphi 0, %s21
    %s24 = sphi 0, %s22
    %s25 = sphi 0, %s23
    %s26 = sphi 0, %s24
    %s38 = sphi 0, %s40
    %s41 = sphi 0, %s38
    %s42 = sphi 0, %s41
    %s58 = sphi 0, %s42
    %s64 = sphi 0, %s66
    %s67 = sphi 0, %s64
    %s68 = sphi 0, %s67
    %s84 = sphi 0, %s68
    %s88 = sphi 0, %s88
    %s90 = sphi 0, %s88
    %s91 = sphi 0, %s90
    %s105 = sphi 0, %s91
    %s109 = sphi 0, %s109
    %s111 = sphi 0, %s109
    %s112 = sphi 0, %s111
    %s126 = sphi 0, %s112
    %s130 = sphi 0, %s130
    %s132 = sphi 0, %s130
    %s133 = sphi 0, %s132
    %s147 = sphi 0, %s133
    %s151 = sphi 0, %s151
    %s153 = sphi 0, %s151
    %s154 = sphi 0, %s153
    %s168 = sphi 0, %s154
    %s172 = sphi 0, %s172
    %s174 = sphi 0, %s172
    %s175 = sphi 0, %s174
    %s189 = sphi 0, %s175
    %s193 = sphi 0, %s193
    %s195 = sphi 0, %s193
    %s196 = sphi 0, %s195
    %s210 = sphi 0, %s196
    %s216 = sphi 0, %s218
    %s219 = sphi 0, %s216
    %s220 = sphi 0, %s219
    %s236 = sphi 0, %s220
  $region4: #{cnn_forward.1} parent=0 // loop_header_branch
    %17 = sbr.rel (%p15) target = $region8
  $region5: #{cnn_forward.1} parent=0 // loop_body
    %s19 = ssub.s32 %s14, 1
    %s20 = ssub.s32 %s14, 2
    %s27 = sadd.s32 1, %s22
    %p28 = scmp.ge.s32.totalorder %s27, 1
    %s29 = scalar_select %p28, 0, %s27
    %s30 = sadd.s32 1, %s21
    %s31 = scalar_select %p28, %s30, %s21
    %p32 = scmp.ge.s32.totalorder %s31, 2
    %s33 = scalar_select %p32, 0, %s31
    %s34 = sadd.s32 %s21, %s22
    %s35 = sadd.s32 %s33, %s29
    %s36 = ssub.s32 %s34, %s35
    %p37 = scmp.eq.s32.totalorder %s36, 0
    %s39 = sadd.s32 %s38, 1
    %s40 = scalar_select %p37, %s38, %s39
    %p43 = pneg %p37
    %p44 = scmp.eq.s32.totalorder %s14, 1
    %p45 = por %p43, %p44
    %p46 = scmp.ne.s32.totalorder %s38, %s41
    %p47 = scmp.eq.s32.totalorder %s14, 0
    %p48 = por %p46, %p47
    %p49 = scmp.ne.s32.totalorder %s38, %s41
    %p50 = scmp.eq.s32.totalorder %s19, 1
    %p51 = por %p49, %p50
    %p52 = scmp.ne.s32.totalorder %s41, %s42
    %p53 = scmp.eq.s32.totalorder %s19, 0
    %p54 = por %p52, %p53
    %p55 = scmp.ne.s32.totalorder %s41, %s42
    %p56 = scmp.eq.s32.totalorder %s20, 1
    %p57 = por %p55, %p56
    %p59 = scmp.ne.s32.totalorder %s42, %s58
    %p60 = scmp.eq.s32.totalorder %s20, 0
    %p61 = por %p59, %p60
    %s62 = ssub.s32 %s22, %s29
    %p63 = scmp.eq.s32.totalorder %s62, 0
    %s65 = sadd.s32 %s64, 1
    %s66 = scalar_select %p63, %s64, %s65
    %p69 = pneg %p63
    %p70 = scmp.eq.s32.totalorder %s14, 1
    %p71 = por %p69, %p70
    %p72 = scmp.ne.s32.totalorder %s64, %s67
    %p73 = scmp.eq.s32.totalorder %s14, 0
    %p74 = por %p72, %p73
    %p75 = scmp.ne.s32.totalorder %s64, %s67
    %p76 = scmp.eq.s32.totalorder %s19, 1
    %p77 = por %p75, %p76
    %p78 = scmp.ne.s32.totalorder %s67, %s68
    %p79 = scmp.eq.s32.totalorder %s19, 0
    %p80 = por %p78, %p79
    %p81 = scmp.ne.s32.totalorder %s67, %s68
    %p82 = scmp.eq.s32.totalorder %s20, 1
    %p83 = por %p81, %p82
    %p85 = scmp.ne.s32.totalorder %s68, %s84
    %p86 = scmp.eq.s32.totalorder %s20, 0
    %p87 = por %p85, %p86
    %s89 = sadd.s32 %s88, 1
    %p92 = scmp.eq.s32.totalorder %s14, 1
    %p93 = scmp.ne.s32.totalorder %s88, %s90
    %p94 = scmp.eq.s32.totalorder %s14, 0
    %p95 = por %p93, %p94
    %p96 = scmp.ne.s32.totalorder %s88, %s90
    %p97 = scmp.eq.s32.totalorder %s19, 1
    %p98 = por %p96, %p97
    %p99 = scmp.ne.s32.totalorder %s90, %s91
    %p100 = scmp.eq.s32.totalorder %s19, 0
    %p101 = por %p99, %p100
    %p102 = scmp.ne.s32.totalorder %s90, %s91
    %p103 = scmp.eq.s32.totalorder %s20, 1
    %p104 = por %p102, %p103
    %p106 = scmp.ne.s32.totalorder %s91, %s105
    %p107 = scmp.eq.s32.totalorder %s20, 0
    %p108 = por %p106, %p107
    %s110 = sadd.s32 %s109, 1
    %p113 = scmp.eq.s32.totalorder %s14, 1
    %p114 = scmp.ne.s32.totalorder %s109, %s111
    %p115 = scmp.eq.s32.totalorder %s14, 0
    %p116 = por %p114, %p115
    %p117 = scmp.ne.s32.totalorder %s109, %s111
    %p118 = scmp.eq.s32.totalorder %s19, 1
    %p119 = por %p117, %p118
    %p120 = scmp.ne.s32.totalorder %s111, %s112
    %p121 = scmp.eq.s32.totalorder %s19, 0
    %p122 = por %p120, %p121
    %p123 = scmp.ne.s32.totalorder %s111, %s112
    %p124 = scmp.eq.s32.totalorder %s20, 1
    %p125 = por %p123, %p124
    %p127 = scmp.ne.s32.totalorder %s112, %s126
    %p128 = scmp.eq.s32.totalorder %s20, 0
    %p129 = por %p127, %p128
    %s131 = sadd.s32 %s130, 1
    %p134 = scmp.eq.s32.totalorder %s14, 1
    %p135 = scmp.ne.s32.totalorder %s130, %s132
    %p136 = scmp.eq.s32.totalorder %s14, 0
    %p137 = por %p135, %p136
    %p138 = scmp.ne.s32.totalorder %s130, %s132
    %p139 = scmp.eq.s32.totalorder %s19, 1
    %p140 = por %p138, %p139
    %p141 = scmp.ne.s32.totalorder %s132, %s133
    %p142 = scmp.eq.s32.totalorder %s19, 0
    %p143 = por %p141, %p142
    %p144 = scmp.ne.s32.totalorder %s132, %s133
    %p145 = scmp.eq.s32.totalorder %s20, 1
    %p146 = por %p144, %p145
    %p148 = scmp.ne.s32.totalorder %s133, %s147
    %p149 = scmp.eq.s32.totalorder %s20, 0
    %p150 = por %p148, %p149
    %s152 = sadd.s32 %s151, 1
    %p155 = scmp.eq.s32.totalorder %s14, 1
    %p156 = scmp.ne.s32.totalorder %s151, %s153
    %p157 = scmp.eq.s32.totalorder %s14, 0
    %p158 = por %p156, %p157
    %p159 = scmp.ne.s32.totalorder %s151, %s153
    %p160 = scmp.eq.s32.totalorder %s19, 1
    %p161 = por %p159, %p160
    %p162 = scmp.ne.s32.totalorder %s153, %s154
    %p163 = scmp.eq.s32.totalorder %s19, 0
    %p164 = por %p162, %p163
    %p165 = scmp.ne.s32.totalorder %s153, %s154
    %p166 = scmp.eq.s32.totalorder %s20, 1
    %p167 = por %p165, %p166
    %p169 = scmp.ne.s32.totalorder %s154, %s168
    %p170 = scmp.eq.s32.totalorder %s20, 0
    %p171 = por %p169, %p170
    %s173 = sadd.s32 %s172, 1
    %p176 = scmp.eq.s32.totalorder %s14, 1
    %p177 = scmp.ne.s32.totalorder %s172, %s174
    %p178 = scmp.eq.s32.totalorder %s14, 0
    %p179 = por %p177, %p178
    %p180 = scmp.ne.s32.totalorder %s172, %s174
    %p181 = scmp.eq.s32.totalorder %s19, 1
    %p182 = por %p180, %p181
    %p183 = scmp.ne.s32.totalorder %s174, %s175
    %p184 = scmp.eq.s32.totalorder %s19, 0
    %p185 = por %p183, %p184
    %p186 = scmp.ne.s32.totalorder %s174, %s175
    %p187 = scmp.eq.s32.totalorder %s20, 1
    %p188 = por %p186, %p187
    %p190 = scmp.ne.s32.totalorder %s175, %s189
    %p191 = scmp.eq.s32.totalorder %s20, 0
    %p192 = por %p190, %p191
    %s194 = sadd.s32 %s193, 1
    %p197 = scmp.eq.s32.totalorder %s14, 1
    %p198 = scmp.ne.s32.totalorder %s193, %s195
    %p199 = scmp.eq.s32.totalorder %s14, 0
    %p200 = por %p198, %p199
    %p201 = scmp.ne.s32.totalorder %s193, %s195
    %p202 = scmp.eq.s32.totalorder %s19, 1
    %p203 = por %p201, %p202
    %p204 = scmp.ne.s32.totalorder %s195, %s196
    %p205 = scmp.eq.s32.totalorder %s19, 0
    %p206 = por %p204, %p205
    %p207 = scmp.ne.s32.totalorder %s195, %s196
    %p208 = scmp.eq.s32.totalorder %s20, 1
    %p209 = por %p207, %p208
    %p211 = scmp.ne.s32.totalorder %s196, %s210
    %p212 = scmp.eq.s32.totalorder %s20, 0
    %p213 = por %p211, %p212
    %s214 = ssub.s32 %s21, %s33
    %p215 = scmp.eq.s32.totalorder %s214, 0
    %s217 = sadd.s32 %s216, 1
    %s218 = scalar_select %p215, %s216, %s217
    %p221 = pneg %p215
    %p222 = scmp.eq.s32.totalorder %s14, 1
    %p223 = por %p221, %p222
    %p224 = scmp.ne.s32.totalorder %s216, %s219
    %p225 = scmp.eq.s32.totalorder %s14, 0
    %p226 = por %p224, %p225
    %p227 = scmp.ne.s32.totalorder %s216, %s219
    %p228 = scmp.eq.s32.totalorder %s19, 1
    %p229 = por %p227, %p228
    %p230 = scmp.ne.s32.totalorder %s219, %s220
    %p231 = scmp.eq.s32.totalorder %s19, 0
    %p232 = por %p230, %p231
    %p233 = scmp.ne.s32.totalorder %s219, %s220
    %p234 = scmp.eq.s32.totalorder %s20, 1
    %p235 = por %p233, %p234
    %p237 = scmp.ne.s32.totalorder %s220, %s236
    %p238 = scmp.eq.s32.totalorder %s20, 0
    %p239 = por %p237, %p238
    %p240 = scmp.le.s32.totalorder 1, %s14
    %p241 = scmp.lt.s32.totalorder %s14, 3
    %p242 = pnand %p240, %p241
    %p243 = pneg %p242
    // Predicated region
    $region9: #{cnn_forward.1} parent=5 // pred_check
      _
    $region10: #{cnn_forward.1} parent=5 // pred_check_branch
      %245 = sbr.rel (%p242) target = $region12
    $region11: #{cnn_forward.1} parent=5 // pred_region
      %s246 = ssub.s32 %s14, 1
      // Predicated region
      $region13: #{cnn_forward.1} parent=11 // pred_check
        %p247 = pneg %p80
      $region14: #{cnn_forward.1} parent=11 // pred_check_branch
        %249 = sbr.rel (%p247) target = $region16
      $region15: #{cnn_forward.1} parent=11 // pred_region
        %p250 = scmp.lt.s32.totalorder %s24, 0
        %s251 = scalar_select %p250, %s24, 0
        %s252 = smul.addr %s251, 2
        %s253 = smul.addr %s252, 4
        %s254 = scalar_lea.vmem %s1, %s253
      $region16: #{cnn_forward.1} parent=11 // pred_fallthru
        _
      // Predicated region
      $region17: #{cnn_forward.1} parent=11 // pred_check
        %p255 = pneg %p101
      $region18: #{cnn_forward.1} parent=11 // pred_check_branch
        %257 = sbr.rel (%p255) target = $region20
      $region19: #{cnn_forward.1} parent=11 // pred_region
        _
      $region20: #{cnn_forward.1} parent=11 // pred_fallthru
        _
      // Predicated region
      $region21: #{cnn_forward.1} parent=11 // pred_check
        %p258 = pneg %p122
      $region22: #{cnn_forward.1} parent=11 // pred_check_branch
        %260 = sbr.rel (%p258) target = $region24
      $region23: #{cnn_forward.1} parent=11 // pred_region
        _
      $region24: #{cnn_forward.1} parent=11 // pred_fallthru
        _
      // Predicated region
      $region25: #{cnn_forward.1} parent=11 // pred_check
        %p261 = pneg %p143
      $region26: #{cnn_forward.1} parent=11 // pred_check_branch
        %263 = sbr.rel (%p261) target = $region28
      $region27: #{cnn_forward.1} parent=11 // pred_region
        _
      $region28: #{cnn_forward.1} parent=11 // pred_fallthru
        _
      // Predicated region
      $region29: #{cnn_forward.1} parent=11 // pred_check
        %p264 = pneg %p164
      $region30: #{cnn_forward.1} parent=11 // pred_check_branch
        %266 = sbr.rel (%p264) target = $region32
      $region31: #{cnn_forward.1} parent=11 // pred_region
        _
      $region32: #{cnn_forward.1} parent=11 // pred_fallthru
        _
      // Predicated region
      $region33: #{cnn_forward.1} parent=11 // pred_check
        %p267 = pneg %p185
      $region34: #{cnn_forward.1} parent=11 // pred_check_branch
        %269 = sbr.rel (%p267) target = $region36
      $region35: #{cnn_forward.1} parent=11 // pred_region
        _
      $region36: #{cnn_forward.1} parent=11 // pred_fallthru
        _
      // Predicated region
      $region37: #{cnn_forward.1} parent=11 // pred_check
        %p270 = pneg %p206
      $region38: #{cnn_forward.1} parent=11 // pred_check_branch
        %272 = sbr.rel (%p270) target = $region40
      $region39: #{cnn_forward.1} parent=11 // pred_region
        _
      $region40: #{cnn_forward.1} parent=11 // pred_fallthru
        _
    $region12: #{cnn_forward.1} parent=5 // pred_fallthru
      _
    %p273 = scmp.lt.s32.totalorder %s14, 2
    // Predicated region
    $region41: #{cnn_forward.1} parent=5 // pred_check
      %p274 = pneg %p273
    $region42: #{cnn_forward.1} parent=5 // pred_check_branch
      %276 = sbr.rel (%p274) target = $region44
    $region43: #{cnn_forward.1} parent=5 // pred_region
      // Predicated region
      $region45: #{cnn_forward.1} parent=43 // pred_check
        %p277 = pneg %p48
      $region46: #{cnn_forward.1} parent=43 // pred_check_branch
        %279 = sbr.rel (%p277) target = $region48
      $region47: #{cnn_forward.1} parent=43 // pred_region
        %s280 = sadd.s32 %s21, %s22
        %s281 = smul.u32 32, %s280
        %p282 = scmp.lt.s32.totalorder %s281, 63
        %s283 = scalar_select %p282, %s281, 63
        %s284 = smul.addr %s283, 4
        %s285 = scalar_lea.vmem %s0, %s284
        %s286 = sadd.s32 %s21, %s22
        %s287 = smul.u32 32, %s286
      $region48: #{cnn_forward.1} parent=43 // pred_fallthru
        _
    $region44: #{cnn_forward.1} parent=5 // pred_fallthru
      _
    %p288 = scmp.le.s32.totalorder 1, %s14
    %p289 = scmp.lt.s32.totalorder %s14, 3
    %p290 = pnand %p288, %p289
    %p291 = pneg %p290
    // Predicated region
    $region49: #{cnn_forward.1} parent=5 // pred_check
      _
    $region50: #{cnn_forward.1} parent=5 // pred_check_branch
      %293 = sbr.rel (%p290) target = $region52
    $region51: #{cnn_forward.1} parent=5 // pred_region
      %s294 = ssub.s32 %s14, 1
      %s295 = sadd.s32 %s23, %s24
      %s296 = smul.u32 32, %s295
      %p297 = scmp.lt.s32.totalorder %s296, 63
      %s298 = scalar_select %p297, %s296, 63
      %s299 = smul.addr %s298, 4
      %s300 = scalar_lea.vmem %s0, %s299
      %p301 = pneg %p54
      %p302 = pneg %p51
      %p303 = scmp.lt.s32.totalorder %s24, 0
      %s304 = scalar_select %p303, %s24, 0
      %s305 = smul.addr %s304, 2
      %s306 = smul.addr %s305, 4
      %s307 = scalar_lea.vmem %s1, %s306
      %p308 = pneg %p80
      %p309 = pneg %p77
      %p310 = pneg %p101
      %p311 = pneg %p98
      %p312 = pneg %p122
      %p313 = pneg %p119
      %p314 = pneg %p143
      %p315 = pneg %p140
      %p316 = pneg %p164
      %p317 = pneg %p161
      %p318 = pneg %p185
      %p319 = pneg %p182
      %p320 = pneg %p206
      %p321 = pneg %p203
      %p322 = pneg %p232
      %p323 = pneg %p229
      %p324 = scmp.lt.s32.totalorder %s23, 1
      %s325 = scalar_select %p324, %s23, 1
      %s326 = smul.addr %s325, 8
      %s327 = scalar_lea.vmem %s8, %s326
      %s328 = sadd.s32 %s23, %s24
      %s329 = smul.u32 32, %s328
      %p330 = scmp.lt.s32.totalorder %s329, 63
      %s331 = scalar_select %p330, %s329, 63
      %s332 = smul.addr %s331, 4
      %s333 = scalar_lea.vmem %s0, %s332
      %s334 = sadd.s32 %s23, %s24
      %s335 = smul.u32 32, %s334
      %p336 = scmp.lt.s32.totalorder %s24, 0
      %s337 = scalar_select %p336, %s24, 0
      %s338 = smul.addr %s337, 2
      %s339 = smul.addr %s338, 4
      %s340 = scalar_lea.vmem %s1, %s339
      %p341 = scmp.lt.s32.totalorder %s23, 1
      %s342 = scalar_select %p341, %s23, 1
      %s343 = smul.addr %s342, 8
      %s344 = scalar_lea.vmem %s8, %s343
      %p346 = scmp.eq.s32.totalorder %s24, 0
      // Predicated region
      $region53: #{cnn_forward.1} parent=51 // pred_check
        %p347 = pneg %p346
      $region54: #{cnn_forward.1} parent=51 // pred_check_branch
        %349 = sbr.rel (%p347) target = $region56
      $region55: #{cnn_forward.1} parent=51 // pred_region
        %350 = vst [vmem:[#allocation3] sm:$0xff] 0.0
        %351 = vst [vmem:[#allocation2] sm:$0xff] 0
        %352 = vst [vmem:[#allocation2 + $0x8] sm:$0xff] 0
        %353 = vst [vmem:[#allocation2 + $0x10] sm:$0xff] 0
        %354 = vst [vmem:[#allocation2 + $0x18] sm:$0xff] 0
        %355 = vst [vmem:[#allocation2 + $0x20] sm:$0xff] 0
        %356 = vst [vmem:[#allocation2 + $0x28] sm:$0xff] 0
        %357 = vst [vmem:[#allocation2 + $0x30] sm:$0xff] 0
        %358 = vst [vmem:[#allocation2 + $0x38] sm:$0xff] 0
        %359 = vst [vmem:[#allocation2 + $0x40] sm:$0xff] 0
        %360 = vst [vmem:[#allocation2 + $0x48] sm:$0xff] 0
        %361 = vst [vmem:[#allocation2 + $0x50] sm:$0xff] 0
        %362 = vst [vmem:[#allocation2 + $0x58] sm:$0xff] 0
        %363 = vst [vmem:[#allocation2 + $0x60] sm:$0xff] 0
        %364 = vst [vmem:[#allocation2 + $0x68] sm:$0xff] 0
        %365 = vst [vmem:[#allocation2 + $0x70] sm:$0xff] 0
        %366 = vst [vmem:[#allocation2 + $0x78] sm:$0xff] 0
      $region56: #{cnn_forward.1} parent=51 // pred_fallthru
        _
      %v367 = vld [vmem:[%s333] sm:$0xf]
      %v368 = vld [vmem:[%s333 + $0x4] sm:$0xf]
      %v369 = vld [vmem:[%s333 + $0x8] sm:$0xf]
      %v370 = vld [vmem:[%s333 + $0xc] sm:$0xf]
      %v371 = vld [vmem:[%s333 + $0x10] sm:$0xf]
      %v372 = vld [vmem:[%s333 + $0x14] sm:$0xf]
      %v373 = vld [vmem:[%s333 + $0x18] sm:$0xf]
      %v374 = vld [vmem:[%s333 + $0x1c] sm:$0xf]
      %v375 = vld [vmem:[%s333 + $0x20] sm:$0xf]
      %v376 = vld [vmem:[%s333 + $0x24] sm:$0xf]
      %v377 = vld [vmem:[%s333 + $0x28] sm:$0xf]
      %v378 = vld [vmem:[%s333 + $0x2c] sm:$0xf]
      %v379 = vld [vmem:[%s333 + $0x30] sm:$0xf]
      %v380 = vld [vmem:[%s333 + $0x34] sm:$0xf]
      %v381 = vld [vmem:[%s333 + $0x38] sm:$0xf]
      %v382 = vld [vmem:[%s333 + $0x3c] sm:$0xf]
      %v383 = vld [vmem:[%s333 + $0x40] sm:$0xf]
      %v384 = vld [vmem:[%s333 + $0x44] sm:$0xf]
      %v385 = vld [vmem:[%s333 + $0x48] sm:$0xf]
      %v386 = vld [vmem:[%s333 + $0x4c] sm:$0xf]
      %v387 = vld [vmem:[%s333 + $0x50] sm:$0xf]
      %v388 = vld [vmem:[%s333 + $0x54] sm:$0xf]
      %v389 = vld [vmem:[%s333 + $0x58] sm:$0xf]
      %v390 = vld [vmem:[%s333 + $0x5c] sm:$0xf]
      %v391 = vld [vmem:[%s333 + $0x60] sm:$0xf]
      %v392 = vld [vmem:[%s333 + $0x64] sm:$0xf]
      %v393 = vld [vmem:[%s333 + $0x68] sm:$0xf]
      %v394 = vld [vmem:[%s333 + $0x6c] sm:$0xf]
      %v395 = vld [vmem:[%s333 + $0x70] sm:$0xf]
      %v396 = vld [vmem:[%s333 + $0x74] sm:$0xf]
      %v397 = vld [vmem:[%s333 + $0x78] sm:$0xf]
      %v398 = vld [vmem:[%s333 + $0x7c] sm:$0xf]
      %v431 = vunpack.c.l.b16 %v367
      %v432 = vunpack.c.l.b16 %v368
      %v433 = vunpack.c.l.b16 %v369
      %v434 = vunpack.c.l.b16 %v370
      %v435 = vunpack.c.l.b16 %v371
      %v436 = vunpack.c.l.b16 %v372
      %v437 = vunpack.c.l.b16 %v373
      %v438 = vunpack.c.l.b16 %v374
      %v439 = vunpack.c.l.b16 %v375
      %v440 = vunpack.c.l.b16 %v376
      %v441 = vunpack.c.l.b16 %v377
      %v442 = vunpack.c.l.b16 %v378
      %v443 = vunpack.c.l.b16 %v379
      %v444 = vunpack.c.l.b16 %v380
      %v445 = vunpack.c.l.b16 %v381
      %v446 = vunpack.c.l.b16 %v382
      %v447 = vunpack.c.l.b16 %v383
      %v448 = vunpack.c.l.b16 %v384
      %v449 = vunpack.c.l.b16 %v385
      %v450 = vunpack.c.l.b16 %v386
      %v451 = vunpack.c.l.b16 %v387
      %v452 = vunpack.c.l.b16 %v388
      %v453 = vunpack.c.l.b16 %v389
      %v454 = vunpack.c.l.b16 %v390
      %v455 = vunpack.c.l.b16 %v391
      %v456 = vunpack.c.l.b16 %v392
      %v457 = vunpack.c.l.b16 %v393
      %v458 = vunpack.c.l.b16 %v394
      %v459 = vunpack.c.l.b16 %v395
      %v460 = vunpack.c.l.b16 %v396
      %v461 = vunpack.c.l.b16 %v397
      %v462 = vunpack.c.l.b16 %v398
      %v463 = vpack.c.b16 %v432, %v431
      %v464 = vpack.c.b16 %v434, %v433
      %v465 = vpack.c.b16 %v436, %v435
      %v466 = vpack.c.b16 %v438, %v437
      %v467 = vpack.c.b16 %v440, %v439
      %v468 = vpack.c.b16 %v442, %v441
      %v469 = vpack.c.b16 %v444, %v443
      %v470 = vpack.c.b16 %v446, %v445
      %v471 = vpack.c.b16 %v448, %v447
      %v472 = vpack.c.b16 %v450, %v449
      %v473 = vpack.c.b16 %v452, %v451
      %v474 = vpack.c.b16 %v454, %v453
      %v475 = vpack.c.b16 %v456, %v455
      %v476 = vpack.c.b16 %v458, %v457
      %v477 = vpack.c.b16 %v460, %v459
      %v478 = vpack.c.b16 %v462, %v461
      %vm495 = vcmask 293888
      %496 = vst.msk [vmem:[#allocation2] sm:$0xff] %vm495, %v463
      %497 = vst.msk [vmem:[#allocation2 + $0x8] sm:$0xff] %vm495, %v464
      %498 = vst.msk [vmem:[#allocation2 + $0x10] sm:$0xff] %vm495, %v465
      %499 = vst.msk [vmem:[#allocation2 + $0x18] sm:$0xff] %vm495, %v466
      %500 = vst.msk [vmem:[#allocation2 + $0x20] sm:$0xff] %vm495, %v467
      %501 = vst.msk [vmem:[#allocation2 + $0x28] sm:$0xff] %vm495, %v468
      %502 = vst.msk [vmem:[#allocation2 + $0x30] sm:$0xff] %vm495, %v469
      %503 = vst.msk [vmem:[#allocation2 + $0x38] sm:$0xff] %vm495, %v470
      %504 = vst.msk [vmem:[#allocation2 + $0x40] sm:$0xff] %vm495, %v471
      %505 = vst.msk [vmem:[#allocation2 + $0x48] sm:$0xff] %vm495, %v472
      %506 = vst.msk [vmem:[#allocation2 + $0x50] sm:$0xff] %vm495, %v473
      %507 = vst.msk [vmem:[#allocation2 + $0x58] sm:$0xff] %vm495, %v474
      %508 = vst.msk [vmem:[#allocation2 + $0x60] sm:$0xff] %vm495, %v475
      %509 = vst.msk [vmem:[#allocation2 + $0x68] sm:$0xff] %vm495, %v476
      %510 = vst.msk [vmem:[#allocation2 + $0x70] sm:$0xff] %vm495, %v477
      %511 = vst.msk [vmem:[#allocation2 + $0x78] sm:$0xff] %vm495, %v478
      %v512 = vld [vmem:[#allocation2] sm:$0xff]
      %v513 = vld [vmem:[#allocation2 + $0x8] sm:$0xff]
      %v514 = vld [vmem:[#allocation2 + $0x10] sm:$0xff]
      %v515 = vld [vmem:[#allocation2 + $0x18] sm:$0xff]
      %v516 = vld [vmem:[#allocation2 + $0x20] sm:$0xff]
      %v517 = vld [vmem:[#allocation2 + $0x28] sm:$0xff]
      %v518 = vld [vmem:[#allocation2 + $0x30] sm:$0xff]
      %v519 = vld [vmem:[#allocation2 + $0x38] sm:$0xff]
      %v520 = vld [vmem:[#allocation2 + $0x40] sm:$0xff]
      %v521 = vld [vmem:[#allocation2 + $0x48] sm:$0xff]
      %v522 = vld [vmem:[#allocation2 + $0x50] sm:$0xff]
      %v523 = vld [vmem:[#allocation2 + $0x58] sm:$0xff]
      %v524 = vld [vmem:[#allocation2 + $0x60] sm:$0xff]
      %v525 = vld [vmem:[#allocation2 + $0x68] sm:$0xff]
      %v526 = vld [vmem:[#allocation2 + $0x70] sm:$0xff]
      %v527 = vld [vmem:[#allocation2 + $0x78] sm:$0xff]
      %v528 = vld [vmem:[%s2] sm:$0xf]
      %v529 = vld [vmem:[%s2 + $0x4] sm:$0xf]
      %v530 = vld [vmem:[%s2 + $0x8] sm:$0xf]
      %v531 = vld [vmem:[%s2 + $0xc] sm:$0xf]
      %v532 = vld [vmem:[%s2 + $0x10] sm:$0xf]
      %v533 = vld [vmem:[%s2 + $0x14] sm:$0xf]
      %v534 = vld [vmem:[%s2 + $0x18] sm:$0xf]
      %v535 = vld [vmem:[%s2 + $0x1c] sm:$0xf]
      %v536 = vld [vmem:[%s2 + $0x20] sm:$0xf]
      %v537 = vld [vmem:[%s2 + $0x24] sm:$0xf]
      %v538 = vld [vmem:[%s2 + $0x28] sm:$0xf]
      %v539 = vld [vmem:[%s2 + $0x2c] sm:$0xf]
      %v540 = vld [vmem:[%s2 + $0x30] sm:$0xf]
      %v541 = vld [vmem:[%s2 + $0x34] sm:$0xf]
      %v542 = vld [vmem:[%s2 + $0x38] sm:$0xf]
      %v543 = vld [vmem:[%s2 + $0x3c] sm:$0xf]
      %v544 = vld [vmem:[%s3] sm:$0x1]
      %v546 = vlaneseq
      %v547 = vshrl.u32 %v546, 7
      %v548 = vsub.s32 0, %v547
      %v549 = vrot.slane %v544, %v548
      %v567 = vunpack.c.l.b16 %v528
      %v568 = vunpack.c.l.b16 %v529
      %v569 = vunpack.c.l.b16 %v530
      %v570 = vunpack.c.l.b16 %v531
      %v571 = vunpack.c.l.b16 %v532
      %v572 = vunpack.c.l.b16 %v533
      %v573 = vunpack.c.l.b16 %v534
      %v574 = vunpack.c.l.b16 %v535
      %v575 = vunpack.c.l.b16 %v536
      %v576 = vunpack.c.l.b16 %v537
      %v577 = vunpack.c.l.b16 %v538
      %v578 = vunpack.c.l.b16 %v539
      %v579 = vunpack.c.l.b16 %v540
      %v580 = vunpack.c.l.b16 %v541
      %v581 = vunpack.c.l.b16 %v542
      %v582 = vunpack.c.l.b16 %v543
      %v583 = vpack.c.b16 %v568, %v567
      %v584 = vpack.c.b16 %v570, %v569
      %v585 = vpack.c.b16 %v572, %v571
      %v586 = vpack.c.b16 %v574, %v573
      %v587 = vpack.c.b16 %v576, %v575
      %v588 = vpack.c.b16 %v578, %v577
      %v589 = vpack.c.b16 %v580, %v579
      %v590 = vpack.c.b16 %v582, %v581
      %599 = vmatprep.subr.bf16.mxu0 0
      %600 = vmatpush1.bf16.msra.mxu0 %v583
      %601 = vmatprep.subr.bf16.mxu0 0
      %602 = vmatpush1.bf16.msra.mxu0 %v584
      %603 = vmatprep.subr.bf16.mxu0 0
      %604 = vmatpush1.bf16.msra.mxu0 %v585
      %605 = vmatprep.subr.bf16.mxu0 0
      %606 = vmatpush1.bf16.msra.mxu0 %v586
      %607 = vmatprep.subr.bf16.mxu0 0
      %608 = vmatpush1.bf16.msra.mxu0 %v587
      %609 = vmatprep.subr.bf16.mxu0 0
      %610 = vmatpush1.bf16.msra.mxu0 %v588
      %611 = vmatprep.subr.bf16.mxu0 0
      %612 = vmatpush1.bf16.msra.mxu0 %v589
      %613 = vmatprep.subr.bf16.mxu0 0
      %614 = vmatpush1.bf16.msra.mxu0 %v590
      %615 = vmatprep.subr.bf16.mxu0 0
      %616 = vmatpush1.bf16.msra.mxu0 0
      %617 = vmatprep.subr.bf16.mxu0 0
      %618 = vmatpush1.bf16.msra.mxu0 0
      %619 = vmatprep.subr.bf16.mxu0 0
      %620 = vmatpush1.bf16.msra.mxu0 0
      %621 = vmatprep.subr.bf16.mxu0 0
      %622 = vmatpush1.bf16.msra.mxu0 0
      %623 = vmatprep.subr.bf16.mxu0 0
      %624 = vmatpush1.bf16.msra.mxu0 0
      %625 = vmatprep.subr.bf16.mxu0 0
      %626 = vmatpush1.bf16.msra.mxu0 0
      %627 = vmatprep.subr.bf16.mxu0 0
      %628 = vmatpush1.bf16.msra.mxu0 0
      %629 = vmatprep.subr.bf16.mxu0 0
      %630 = vmatpush1.bf16.msra.mxu0 0
      %631 = vmatprep.mubr.bf16.mxu0 0
      %632 = vmatmul.mubr.bf16.gmra.mrb[0].mxu0 %v512
      %v633 = vpop.f32.mrb[0].mxu0
      %v634 = vadd.f32 %v549, %v633
      %v635 = vpop.f32.mrb[0].mxu0
      %v636 = vpop.f32.mrb[0].mxu0
      %v637 = vadd.f32 %v549, %v636
      %v638 = vpop.f32.mrb[0].mxu0
      %639 = vmatprep.mubr.bf16.mxu0 0
      %640 = vmatmul.mubr.bf16.gmra.mrb[0].mxu0 %v513
      %v641 = vpop.f32.mrb[0].mxu0
      %v642 = vadd.f32 %v549, %v641
      %v643 = vpop.f32.mrb[0].mxu0
      %v644 = vpop.f32.mrb[0].mxu0
      %v645 = vadd.f32 %v549, %v644
      %v646 = vpop.f32.mrb[0].mxu0
      %647 = vmatprep.mubr.bf16.mxu0 0
      %648 = vmatmul.mubr.bf16.gmra.mrb[0].mxu0 %v514
      %v649 = vpop.f32.mrb[0].mxu0
      %v650 = vadd.f32 %v549, %v649
      %v651 = vpop.f32.mrb[0].mxu0
      %v652 = vpop.f32.mrb[0].mxu0
      %v653 = vadd.f32 %v549, %v652
      %v654 = vpop.f32.mrb[0].mxu0
      %655 = vmatprep.mubr.bf16.mxu0 0
      %656 = vmatmul.mubr.bf16.gmra.mrb[0].mxu0 %v515
      %v657 = vpop.f32.mrb[0].mxu0
      %v658 = vadd.f32 %v549, %v657
      %v659 = vpop.f32.mrb[0].mxu0
      %v660 = vpop.f32.mrb[0].mxu0
      %v661 = vadd.f32 %v549, %v660
      %v662 = vpop.f32.mrb[0].mxu0
      %663 = vmatprep.mubr.bf16.mxu0 0
      %664 = vmatmul.mubr.bf16.gmra.mrb[0].mxu0 %v516
      %v665 = vpop.f32.mrb[0].mxu0
      %v666 = vadd.f32 %v549, %v665
      %v667 = vpop.f32.mrb[0].mxu0
      %v668 = vpop.f32.mrb[0].mxu0
      %v669 = vadd.f32 %v549, %v668
      %v670 = vpop.f32.mrb[0].mxu0
      %671 = vmatprep.mubr.bf16.mxu0 0
      %672 = vmatmul.mubr.bf16.gmra.mrb[0].mxu0 %v517
      %v673 = vpop.f32.mrb[0].mxu0
      %v674 = vadd.f32 %v549, %v673
      %v675 = vpop.f32.mrb[0].mxu0
      %v676 = vpop.f32.mrb[0].mxu0
      %v677 = vadd.f32 %v549, %v676
      %v678 = vpop.f32.mrb[0].mxu0
      %679 = vmatprep.mubr.bf16.mxu0 0
      %680 = vmatmul.mubr.bf16.gmra.mrb[0].mxu0 %v518
      %v681 = vpop.f32.mrb[0].mxu0
      %v682 = vadd.f32 %v549, %v681
      %v683 = vpop.f32.mrb[0].mxu0
      %v684 = vpop.f32.mrb[0].mxu0
      %v685 = vadd.f32 %v549, %v684
      %v686 = vpop.f32.mrb[0].mxu0
      %687 = vmatprep.mubr.bf16.mxu0 0
      %688 = vmatmul.mubr.bf16.gmra.mrb[0].mxu0 %v519
      %v689 = vpop.f32.mrb[0].mxu0
      %v690 = vadd.f32 %v549, %v689
      %v691 = vpop.f32.mrb[0].mxu0
      %v692 = vpop.f32.mrb[0].mxu0
      %v693 = vadd.f32 %v549, %v692
      %v694 = vpop.f32.mrb[0].mxu0
      %695 = vmatprep.mubr.bf16.mxu0 0
      %696 = vmatmul.mubr.bf16.gmra.mrb[0].mxu0 %v520
      %v697 = vpop.f32.mrb[0].mxu0
      %v698 = vadd.f32 %v549, %v697
      %v699 = vpop.f32.mrb[0].mxu0
      %v700 = vpop.f32.mrb[0].mxu0
      %v701 = vadd.f32 %v549, %v700
      %v702 = vpop.f32.mrb[0].mxu0
      %703 = vmatprep.mubr.bf16.mxu0 0
      %704 = vmatmul.mubr.bf16.gmra.mrb[0].mxu0 %v521
      %v705 = vpop.f32.mrb[0].mxu0
      %v706 = vadd.f32 %v549, %v705
      %v707 = vpop.f32.mrb[0].mxu0
      %v708 = vpop.f32.mrb[0].mxu0
      %v709 = vadd.f32 %v549, %v708
      %v710 = vpop.f32.mrb[0].mxu0
      %711 = vmatprep.mubr.bf16.mxu0 0
      %712 = vmatmul.mubr.bf16.gmra.mrb[0].mxu0 %v522
      %v713 = vpop.f32.mrb[0].mxu0
      %v714 = vadd.f32 %v549, %v713
      %v715 = vpop.f32.mrb[0].mxu0
      %v716 = vpop.f32.mrb[0].mxu0
      %v717 = vadd.f32 %v549, %v716
      %v718 = vpop.f32.mrb[0].mxu0
      %719 = vmatprep.mubr.bf16.mxu0 0
      %720 = vmatmul.mubr.bf16.gmra.mrb[0].mxu0 %v523
      %v721 = vpop.f32.mrb[0].mxu0
      %v722 = vadd.f32 %v549, %v721
      %v723 = vpop.f32.mrb[0].mxu0
      %v724 = vpop.f32.mrb[0].mxu0
      %v725 = vadd.f32 %v549, %v724
      %v726 = vpop.f32.mrb[0].mxu0
      %727 = vmatprep.mubr.bf16.mxu0 0
      %728 = vmatmul.mubr.bf16.gmra.mrb[0].mxu0 %v524
      %v729 = vpop.f32.mrb[0].mxu0
      %v730 = vadd.f32 %v549, %v729
      %v731 = vpop.f32.mrb[0].mxu0
      %v732 = vpop.f32.mrb[0].mxu0
      %v733 = vadd.f32 %v549, %v732
      %v734 = vpop.f32.mrb[0].mxu0
      %735 = vmatprep.mubr.bf16.mxu0 0
      %736 = vmatmul.mubr.bf16.gmra.mrb[0].mxu0 %v525
      %v737 = vpop.f32.mrb[0].mxu0
      %v738 = vadd.f32 %v549, %v737
      %v739 = vpop.f32.mrb[0].mxu0
      %v740 = vpop.f32.mrb[0].mxu0
      %v741 = vadd.f32 %v549, %v740
      %v742 = vpop.f32.mrb[0].mxu0
      %743 = vmatprep.mubr.bf16.mxu0 0
      %744 = vmatmul.mubr.bf16.gmra.mrb[0].mxu0 %v526
      %v745 = vpop.f32.mrb[0].mxu0
      %v746 = vadd.f32 %v549, %v745
      %v747 = vpop.f32.mrb[0].mxu0
      %v748 = vpop.f32.mrb[0].mxu0
      %v749 = vadd.f32 %v549, %v748
      %v750 = vpop.f32.mrb[0].mxu0
      %751 = vmatprep.mubr.bf16.mxu0 0
      %752 = vmatmul.mubr.bf16.gmra.mrb[0].mxu0 %v527
      %v753 = vpop.f32.mrb[0].mxu0
      %v754 = vadd.f32 %v549, %v753
      %v755 = vpop.f32.mrb[0].mxu0
      %v756 = vpop.f32.mrb[0].mxu0
      %v757 = vadd.f32 %v549, %v756
      %v758 = vpop.f32.mrb[0].mxu0
      %759 = vdwg.mxu0
      %v760 = vmax.f32 %v634, 0.0
      %v761 = vmax.f32 %v637, 0.0
      %v762 = vmax.f32 %v642, 0.0
      %v763 = vmax.f32 %v645, 0.0
      %v764 = vmax.f32 %v650, 0.0
      %v765 = vmax.f32 %v653, 0.0
      %v766 = vmax.f32 %v658, 0.0
      %v767 = vmax.f32 %v661, 0.0
      %v768 = vmax.f32 %v666, 0.0
      %v769 = vmax.f32 %v669, 0.0
      %v770 = vmax.f32 %v674, 0.0
      %v771 = vmax.f32 %v677, 0.0
      %v772 = vmax.f32 %v682, 0.0
      %v773 = vmax.f32 %v685, 0.0
      %v774 = vmax.f32 %v690, 0.0
      %v775 = vmax.f32 %v693, 0.0
      %v776 = vmax.f32 %v698, 0.0
      %v777 = vmax.f32 %v701, 0.0
      %v778 = vmax.f32 %v706, 0.0
      %v779 = vmax.f32 %v709, 0.0
      %v780 = vmax.f32 %v714, 0.0
      %v781 = vmax.f32 %v717, 0.0
      %v782 = vmax.f32 %v722, 0.0
      %v783 = vmax.f32 %v725, 0.0
      %v784 = vmax.f32 %v730, 0.0
      %v785 = vmax.f32 %v733, 0.0
      %v786 = vmax.f32 %v738, 0.0
      %v787 = vmax.f32 %v741, 0.0
      %v788 = vmax.f32 %v746, 0.0
      %v789 = vmax.f32 %v749, 0.0
      %v790 = vmax.f32 %v754, 0.0
      %v791 = vmax.f32 %v757, 0.0
      %v792 = vld [vmem:[#allocation3] sm:$0xff]
      %v793 = vld [vmem:[%s340] sm:$0xff]
      %v794 = vpack.c.bf16 %v761, %v760
      %v795 = vpack.c.bf16 %v763, %v762
      %v796 = vpack.c.bf16 %v765, %v764
      %v797 = vpack.c.bf16 %v767, %v766
      %v798 = vpack.c.bf16 %v769, %v768
      %v799 = vpack.c.bf16 %v771, %v770
      %v800 = vpack.c.bf16 %v773, %v772
      %v801 = vpack.c.bf16 %v775, %v774
      %v802 = vpack.c.bf16 %v777, %v776
      %v803 = vpack.c.bf16 %v779, %v778
      %v804 = vpack.c.bf16 %v781, %v780
      %v805 = vpack.c.bf16 %v783, %v782
      %v806 = vpack.c.bf16 %v785, %v784
      %v807 = vpack.c.bf16 %v787, %v786
      %v808 = vpack.c.bf16 %v789, %v788
      %v809 = vpack.c.bf16 %v791, %v790
      %v811 = vunpack.c.l.b16 %v793
      %v812 = vunpack.c.h.b16 %v793
      %v813 = vpack.c.b16 %v811, %v811
      %v814 = vpack.c.b16 %v812, %v812
      %817 = vmatprep.subr.bf16.mxu0 0
      %818 = vmatpush1.bf16.msra.mxu0 %v794
      %819 = vmatprep.subr.bf16.mxu0 0
      %820 = vmatpush1.bf16.msra.mxu0 %v795
      %821 = vmatprep.subr.bf16.mxu0 0
      %822 = vmatpush1.bf16.msra.mxu0 %v796
      %823 = vmatprep.subr.bf16.mxu0 0
      %824 = vmatpush1.bf16.msra.mxu0 %v797
      %825 = vmatprep.subr.bf16.mxu0 0
      %826 = vmatpush1.bf16.msra.mxu0 %v798
      %827 = vmatprep.subr.bf16.mxu0 0
      %828 = vmatpush1.bf16.msra.mxu0 %v799
      %829 = vmatprep.subr.bf16.mxu0 0
      %830 = vmatpush1.bf16.msra.mxu0 %v800
      %831 = vmatprep.subr.bf16.mxu0 0
      %832 = vmatpush1.bf16.msra.mxu0 %v801
      %833 = vmatprep.subr.bf16.mxu0 0
      %834 = vmatpush1.bf16.msra.mxu0 %v802
      %835 = vmatprep.subr.bf16.mxu0 0
      %836 = vmatpush1.bf16.msra.mxu0 %v803
      %837 = vmatprep.subr.bf16.mxu0 0
      %838 = vmatpush1.bf16.msra.mxu0 %v804
      %839 = vmatprep.subr.bf16.mxu0 0
      %840 = vmatpush1.bf16.msra.mxu0 %v805
      %841 = vmatprep.subr.bf16.mxu0 0
      %842 = vmatpush1.bf16.msra.mxu0 %v806
      %843 = vmatprep.subr.bf16.mxu0 0
      %844 = vmatpush1.bf16.msra.mxu0 %v807
      %845 = vmatprep.subr.bf16.mxu0 0
      %846 = vmatpush1.bf16.msra.mxu0 %v808
      %847 = vmatprep.subr.bf16.mxu0 0
      %848 = vmatpush1.bf16.msra.mxu0 %v809
      %849 = vmatprep.mubr.bf16.mxu0 %v814
      %850 = vmatmul.mubr.bf16.gmra.mrb[0].mxu0 %v813
      %v851 = vpop.f32.mrb[0].mxu0
      %v852 = vadd.f32 0.0, %v851
      %v853 = vpop.f32.mrb[0].mxu0
      %v854 = vpop.f32.mrb[0].mxu0
      %v855 = vpop.f32.mrb[0].mxu0
      %856 = vdwg.mxu0
      %v857 = vadd.f32 %v792, %v852
      %858 = vst [vmem:[#allocation3] sm:$0xff] %v857
      // Predicated region
      $region57: #{cnn_forward.1} parent=51 // pred_check
        %p859 = pneg %p346
      $region58: #{cnn_forward.1} parent=51 // pred_check_branch
        %861 = sbr.rel (%p859) target = $region60
      $region59: #{cnn_forward.1} parent=51 // pred_region
        %v862 = vld [vmem:[#allocation3] sm:$0xff]
        %v863 = vmul.f32 %v862, 0.00390625
        %v864 = vpack.c.bf16 %v863, %v863
        %v865 = vld [vmem:[%s4] sm:$0xff]
        %v866 = vld [vmem:[%s4 + $0x8] sm:$0xff]
        %v867 = vld [vmem:[%s4 + $0x10] sm:$0xff]
        %v868 = vld [vmem:[%s4 + $0x18] sm:$0xff]
        %v869 = vld [vmem:[%s4 + $0x20] sm:$0xff]
        %v870 = vld [vmem:[%s4 + $0x28] sm:$0xff]
        %v871 = vld [vmem:[%s4 + $0x30] sm:$0xff]
        %v872 = vld [vmem:[%s4 + $0x38] sm:$0xff]
        %v873 = vld [vmem:[%s4 + $0x40] sm:$0xff]
        %v874 = vld [vmem:[%s4 + $0x48] sm:$0xff]
        %v875 = vld [vmem:[%s4 + $0x50] sm:$0xff]
        %v876 = vld [vmem:[%s4 + $0x58] sm:$0xff]
        %v877 = vld [vmem:[%s4 + $0x60] sm:$0xff]
        %v878 = vld [vmem:[%s4 + $0x68] sm:$0xff]
        %v879 = vld [vmem:[%s4 + $0x70] sm:$0xff]
        %v880 = vld [vmem:[%s4 + $0x78] sm:$0xff]
        %v881 = vld [vmem:[%s4 + $0x80] sm:$0xff]
        %v882 = vld [vmem:[%s4 + $0x88] sm:$0xff]
        %v883 = vld [vmem:[%s4 + $0x90] sm:$0xff]
        %v884 = vld [vmem:[%s4 + $0x98] sm:$0xff]
        %v885 = vld [vmem:[%s4 + $0xa0] sm:$0xff]
        %v886 = vld [vmem:[%s4 + $0xa8] sm:$0xff]
        %v887 = vld [vmem:[%s4 + $0xb0] sm:$0xff]
        %v888 = vld [vmem:[%s4 + $0xb8] sm:$0xff]
        %v889 = vld [vmem:[%s4 + $0xc0] sm:$0xff]
        %v890 = vld [vmem:[%s4 + $0xc8] sm:$0xff]
        %v891 = vld [vmem:[%s4 + $0xd0] sm:$0xff]
        %v892 = vld [vmem:[%s4 + $0xd8] sm:$0xff]
        %v893 = vld [vmem:[%s4 + $0xe0] sm:$0xff]
        %v894 = vld [vmem:[%s4 + $0xe8] sm:$0xff]
        %v895 = vld [vmem:[%s4 + $0xf0] sm:$0xff]
        %v896 = vld [vmem:[%s4 + $0xf8] sm:$0xff]
        %v897 = vld [vmem:[%s4 + $0x100] sm:$0xff]
        %v898 = vld [vmem:[%s4 + $0x108] sm:$0xff]
        %v899 = vld [vmem:[%s4 + $0x110] sm:$0xff]
        %v900 = vld [vmem:[%s4 + $0x118] sm:$0xff]
        %v901 = vld [vmem:[%s4 + $0x120] sm:$0xff]
        %v902 = vld [vmem:[%s4 + $0x128] sm:$0xff]
        %v903 = vld [vmem:[%s4 + $0x130] sm:$0xff]
        %v904 = vld [vmem:[%s4 + $0x138] sm:$0xff]
        %v905 = vld [vmem:[%s4 + $0x140] sm:$0xff]
        %v906 = vld [vmem:[%s4 + $0x148] sm:$0xff]
        %v907 = vld [vmem:[%s4 + $0x150] sm:$0xff]
        %v908 = vld [vmem:[%s4 + $0x158] sm:$0xff]
        %v909 = vld [vmem:[%s4 + $0x160] sm:$0xff]
        %v910 = vld [vmem:[%s4 + $0x168] sm:$0xff]
        %v911 = vld [vmem:[%s4 + $0x170] sm:$0xff]
        %v912 = vld [vmem:[%s4 + $0x178] sm:$0xff]
        %v913 = vld [vmem:[%s4 + $0x180] sm:$0xff]
        %v914 = vld [vmem:[%s4 + $0x188] sm:$0xff]
        %v915 = vld [vmem:[%s4 + $0x190] sm:$0xff]
        %v916 = vld [vmem:[%s4 + $0x198] sm:$0xff]
        %v917 = vld [vmem:[%s4 + $0x1a0] sm:$0xff]
        %v918 = vld [vmem:[%s4 + $0x1a8] sm:$0xff]
        %v919 = vld [vmem:[%s4 + $0x1b0] sm:$0xff]
        %v920 = vld [vmem:[%s4 + $0x1b8] sm:$0xff]
        %v921 = vld [vmem:[%s4 + $0x1c0] sm:$0xff]
        %v922 = vld [vmem:[%s4 + $0x1c8] sm:$0xff]
        %v923 = vld [vmem:[%s4 + $0x1d0] sm:$0xff]
        %v924 = vld [vmem:[%s4 + $0x1d8] sm:$0xff]
        %v925 = vld [vmem:[%s4 + $0x1e0] sm:$0xff]
        %v926 = vld [vmem:[%s4 + $0x1e8] sm:$0xff]
        %v927 = vld [vmem:[%s4 + $0x1f0] sm:$0xff]
        %v928 = vld [vmem:[%s4 + $0x1f8] sm:$0xff]
        %v929 = vld [vmem:[%s5] sm:$0xff]
        %v931 = vlaneseq
        %v932 = vshrl.u32 %v931, 7
        %v933 = vsub.s32 0, %v932
        %v934 = vrot.slane %v929, %v933
        %v935 = vlaneseq
        %v936 = vshrl.u32 %v935, 7
        %v937 = vsub.s32 1, %v936
        %v938 = vrot.slane %v929, %v937
        %v939 = vlaneseq
        %v940 = vshrl.u32 %v939, 7
        %v941 = vsub.s32 2, %v940
        %v942 = vrot.slane %v929, %v941
        %v943 = vlaneseq
        %v944 = vshrl.u32 %v943, 7
        %v945 = vsub.s32 3, %v944
        %v946 = vrot.slane %v929, %v945
        %v947 = vlaneseq
        %v948 = vshrl.u32 %v947, 7
        %v949 = vsub.s32 4, %v948
        %v950 = vrot.slane %v929, %v949
        %v951 = vlaneseq
        %v952 = vshrl.u32 %v951, 7
        %v953 = vsub.s32 5, %v952
        %v954 = vrot.slane %v929, %v953
        %v955 = vlaneseq
        %v956 = vshrl.u32 %v955, 7
        %v957 = vsub.s32 6, %v956
        %v958 = vrot.slane %v929, %v957
        %v959 = vlaneseq
        %v960 = vshrl.u32 %v959, 7
        %v961 = vsub.s32 7, %v960
        %v962 = vrot.slane %v929, %v961
        %v1035 = vunpack.c.l.b16 %v865
        %v1036 = vunpack.c.h.b16 %v865
        %v1037 = vunpack.c.l.b16 %v866
        %v1038 = vunpack.c.h.b16 %v866
        %v1039 = vunpack.c.l.b16 %v867
        %v1040 = vunpack.c.h.b16 %v867
        %v1041 = vunpack.c.l.b16 %v868
        %v1042 = vunpack.c.h.b16 %v868
        %v1043 = vunpack.c.l.b16 %v869
        %v1044 = vunpack.c.h.b16 %v869
        %v1045 = vunpack.c.l.b16 %v870
        %v1046 = vunpack.c.h.b16 %v870
        %v1047 = vunpack.c.l.b16 %v871
        %v1048 = vunpack.c.h.b16 %v871
        %v1049 = vunpack.c.l.b16 %v872
        %v1050 = vunpack.c.h.b16 %v872
        %v1051 = vunpack.c.l.b16 %v873
        %v1052 = vunpack.c.h.b16 %v873
        %v1053 = vunpack.c.l.b16 %v874
        %v1054 = vunpack.c.h.b16 %v874
        %v1055 = vunpack.c.l.b16 %v875
        %v1056 = vunpack.c.h.b16 %v875
        %v1057 = vunpack.c.l.b16 %v876
        %v1058 = vunpack.c.h.b16 %v876
        %v1059 = vunpack.c.l.b16 %v877
        %v1060 = vunpack.c.h.b16 %v877
        %v1061 = vunpack.c.l.b16 %v878
        %v1062 = vunpack.c.h.b16 %v878
        %v1063 = vunpack.c.l.b16 %v879
        %v1064 = vunpack.c.h.b16 %v879
        %v1065 = vunpack.c.l.b16 %v880
        %v1066 = vunpack.c.h.b16 %v880
        %v1067 = vunpack.c.l.b16 %v881
        %v1068 = vunpack.c.h.b16 %v881
        %v1069 = vunpack.c.l.b16 %v882
        %v1070 = vunpack.c.h.b16 %v882
        %v1071 = vunpack.c.l.b16 %v883
        %v1072 = vunpack.c.h.b16 %v883
        %v1073 = vunpack.c.l.b16 %v884
        %v1074 = vunpack.c.h.b16 %v884
        %v1075 = vunpack.c.l.b16 %v885
        %v1076 = vunpack.c.h.b16 %v885
        %v1077 = vunpack.c.l.b16 %v886
        %v1078 = vunpack.c.h.b16 %v886
        %v1079 = vunpack.c.l.b16 %v887
        %v1080 = vunpack.c.h.b16 %v887
        %v1081 = vunpack.c.l.b16 %v888
        %v1082 = vunpack.c.h.b16 %v888
        %v1083 = vunpack.c.l.b16 %v889
        %v1084 = vunpack.c.h.b16 %v889
        %v1085 = vunpack.c.l.b16 %v890
        %v1086 = vunpack.c.h.b16 %v890
        %v1087 = vunpack.c.l.b16 %v891
        %v1088 = vunpack.c.h.b16 %v891
        %v1089 = vunpack.c.l.b16 %v892
        %v1090 = vunpack.c.h.b16 %v892
        %v1091 = vunpack.c.l.b16 %v893
        %v1092 = vunpack.c.h.b16 %v893
        %v1093 = vunpack.c.l.b16 %v894
        %v1094 = vunpack.c.h.b16 %v894
        %v1095 = vunpack.c.l.b16 %v895
        %v1096 = vunpack.c.h.b16 %v895
        %v1097 = vunpack.c.l.b16 %v896
        %v1098 = vunpack.c.h.b16 %v896
        %v1099 = vunpack.c.l.b16 %v897
        %v1100 = vunpack.c.h.b16 %v897
        %v1101 = vunpack.c.l.b16 %v898
        %v1102 = vunpack.c.h.b16 %v898
        %v1103 = vunpack.c.l.b16 %v899
        %v1104 = vunpack.c.h.b16 %v899
        %v1105 = vunpack.c.l.b16 %v900
        %v1106 = vunpack.c.h.b16 %v900
        %v1107 = vunpack.c.l.b16 %v901
        %v1108 = vunpack.c.h.b16 %v901
        %v1109 = vunpack.c.l.b16 %v902
        %v1110 = vunpack.c.h.b16 %v902
        %v1111 = vunpack.c.l.b16 %v903
        %v1112 = vunpack.c.h.b16 %v903
        %v1113 = vunpack.c.l.b16 %v904
        %v1114 = vunpack.c.h.b16 %v904
        %v1115 = vunpack.c.l.b16 %v905
        %v1116 = vunpack.c.h.b16 %v905
        %v1117 = vunpack.c.l.b16 %v906
        %v1118 = vunpack.c.h.b16 %v906
        %v1119 = vunpack.c.l.b16 %v907
        %v1120 = vunpack.c.h.b16 %v907
        %v1121 = vunpack.c.l.b16 %v908
        %v1122 = vunpack.c.h.b16 %v908
        %v1123 = vunpack.c.l.b16 %v909
        %v1124 = vunpack.c.h.b16 %v909
        %v1125 = vunpack.c.l.b16 %v910
        %v1126 = vunpack.c.h.b16 %v910
        %v1127 = vunpack.c.l.b16 %v911
        %v1128 = vunpack.c.h.b16 %v911
        %v1129 = vunpack.c.l.b16 %v912
        %v1130 = vunpack.c.h.b16 %v912
        %v1131 = vunpack.c.l.b16 %v913
        %v1132 = vunpack.c.h.b16 %v913
        %v1133 = vunpack.c.l.b16 %v914
        %v1134 = vunpack.c.h.b16 %v914
        %v1135 = vunpack.c.l.b16 %v915
        %v1136 = vunpack.c.h.b16 %v915
        %v1137 = vunpack.c.l.b16 %v916
        %v1138 = vunpack.c.h.b16 %v916
        %v1139 = vunpack.c.l.b16 %v917
        %v1140 = vunpack.c.h.b16 %v917
        %v1141 = vunpack.c.l.b16 %v918
        %v1142 = vunpack.c.h.b16 %v918
        %v1143 = vunpack.c.l.b16 %v919
        %v1144 = vunpack.c.h.b16 %v919
        %v1145 = vunpack.c.l.b16 %v920
        %v1146 = vunpack.c.h.b16 %v920
        %v1147 = vunpack.c.l.b16 %v921
        %v1148 = vunpack.c.h.b16 %v921
        %v1149 = vunpack.c.l.b16 %v922
        %v1150 = vunpack.c.h.b16 %v922
        %v1151 = vunpack.c.l.b16 %v923
        %v1152 = vunpack.c.h.b16 %v923
        %v1153 = vunpack.c.l.b16 %v924
        %v1154 = vunpack.c.h.b16 %v924
        %v1155 = vunpack.c.l.b16 %v925
        %v1156 = vunpack.c.h.b16 %v925
        %v1157 = vunpack.c.l.b16 %v926
        %v1158 = vunpack.c.h.b16 %v926
        %v1159 = vunpack.c.l.b16 %v927
        %v1160 = vunpack.c.h.b16 %v927
        %v1161 = vunpack.c.l.b16 %v928
        %v1162 = vunpack.c.h.b16 %v928
        %v1163 = vpack.c.b16 %v1043, %v1035
        %v1164 = vpack.c.b16 %v1044, %v1036
        %v1165 = vpack.c.b16 %v1045, %v1037
        %v1166 = vpack.c.b16 %v1046, %v1038
        %v1167 = vpack.c.b16 %v1047, %v1039
        %v1168 = vpack.c.b16 %v1048, %v1040
        %v1169 = vpack.c.b16 %v1049, %v1041
        %v1170 = vpack.c.b16 %v1050, %v1042
        %v1171 = vpack.c.b16 %v1059, %v1051
        %v1172 = vpack.c.b16 %v1060, %v1052
        %v1173 = vpack.c.b16 %v1061, %v1053
        %v1174 = vpack.c.b16 %v1062, %v1054
        %v1175 = vpack.c.b16 %v1063, %v1055
        %v1176 = vpack.c.b16 %v1064, %v1056
        %v1177 = vpack.c.b16 %v1065, %v1057
        %v1178 = vpack.c.b16 %v1066, %v1058
        %v1179 = vpack.c.b16 %v1075, %v1067
        %v1180 = vpack.c.b16 %v1076, %v1068
        %v1181 = vpack.c.b16 %v1077, %v1069
        %v1182 = vpack.c.b16 %v1078, %v1070
        %v1183 = vpack.c.b16 %v1079, %v1071
        %v1184 = vpack.c.b16 %v1080, %v1072
        %v1185 = vpack.c.b16 %v1081, %v1073
        %v1186 = vpack.c.b16 %v1082, %v1074
        %v1187 = vpack.c.b16 %v1091, %v1083
        %v1188 = vpack.c.b16 %v1092, %v1084
        %v1189 = vpack.c.b16 %v1093, %v1085
        %v1190 = vpack.c.b16 %v1094, %v1086
        %v1191 = vpack.c.b16 %v1095, %v1087
        %v1192 = vpack.c.b16 %v1096, %v1088
        %v1193 = vpack.c.b16 %v1097, %v1089
        %v1194 = vpack.c.b16 %v1098, %v1090
        %v1195 = vpack.c.b16 %v1107, %v1099
        %v1196 = vpack.c.b16 %v1108, %v1100
        %v1197 = vpack.c.b16 %v1109, %v1101
        %v1198 = vpack.c.b16 %v1110, %v1102
        %v1199 = vpack.c.b16 %v1111, %v1103
        %v1200 = vpack.c.b16 %v1112, %v1104
        %v1201 = vpack.c.b16 %v1113, %v1105
        %v1202 = vpack.c.b16 %v1114, %v1106
        %v1203 = vpack.c.b16 %v1123, %v1115
        %v1204 = vpack.c.b16 %v1124, %v1116
        %v1205 = vpack.c.b16 %v1125, %v1117
        %v1206 = vpack.c.b16 %v1126, %v1118
        %v1207 = vpack.c.b16 %v1127, %v1119
        %v1208 = vpack.c.b16 %v1128, %v1120
        %v1209 = vpack.c.b16 %v1129, %v1121
        %v1210 = vpack.c.b16 %v1130, %v1122
        %v1211 = vpack.c.b16 %v1139, %v1131
        %v1212 = vpack.c.b16 %v1140, %v1132
        %v1213 = vpack.c.b16 %v1141, %v1133
        %v1214 = vpack.c.b16 %v1142, %v1134
        %v1215 = vpack.c.b16 %v1143, %v1135
        %v1216 = vpack.c.b16 %v1144, %v1136
        %v1217 = vpack.c.b16 %v1145, %v1137
        %v1218 = vpack.c.b16 %v1146, %v1138
        %v1219 = vpack.c.b16 %v1155, %v1147
        %v1220 = vpack.c.b16 %v1156, %v1148
        %v1221 = vpack.c.b16 %v1157, %v1149
        %v1222 = vpack.c.b16 %v1158, %v1150
        %v1223 = vpack.c.b16 %v1159, %v1151
        %v1224 = vpack.c.b16 %v1160, %v1152
        %v1225 = vpack.c.b16 %v1161, %v1153
        %v1226 = vpack.c.b16 %v1162, %v1154
        %1291 = vmatprep.subr.bf16.mxu0 %v1164
        %1292 = vmatpush1.bf16.msra.mxu0 %v1163
        %1293 = vmatprep.subr.bf16.mxu0 %v1172
        %1294 = vmatpush1.bf16.msra.mxu0 %v1171
        %1295 = vmatprep.subr.bf16.mxu0 %v1180
        %1296 = vmatpush1.bf16.msra.mxu0 %v1179
        %1297 = vmatprep.subr.bf16.mxu0 %v1188
        %1298 = vmatpush1.bf16.msra.mxu0 %v1187
        %1299 = vmatprep.subr.bf16.mxu0 %v1196
        %1300 = vmatpush1.bf16.msra.mxu0 %v1195
        %1301 = vmatprep.subr.bf16.mxu0 %v1204
        %1302 = vmatpush1.bf16.msra.mxu0 %v1203
        %1303 = vmatprep.subr.bf16.mxu0 %v1212
        %1304 = vmatpush1.bf16.msra.mxu0 %v1211
        %1305 = vmatprep.subr.bf16.mxu0 %v1220
        %1306 = vmatpush1.bf16.msra.mxu0 %v1219
        %1307 = vmatprep.subr.bf16.mxu0 0
        %1308 = vmatpush1.bf16.msra.mxu0 0
        %1309 = vmatprep.subr.bf16.mxu0 0
        %1310 = vmatpush1.bf16.msra.mxu0 0
        %1311 = vmatprep.subr.bf16.mxu0 0
        %1312 = vmatpush1.bf16.msra.mxu0 0
        %1313 = vmatprep.subr.bf16.mxu0 0
        %1314 = vmatpush1.bf16.msra.mxu0 0
        %1315 = vmatprep.subr.bf16.mxu0 0
        %1316 = vmatpush1.bf16.msra.mxu0 0
        %1317 = vmatprep.subr.bf16.mxu0 0
        %1318 = vmatpush1.bf16.msra.mxu0 0
        %1319 = vmatprep.subr.bf16.mxu0 0
        %1320 = vmatpush1.bf16.msra.mxu0 0
        %1321 = vmatprep.subr.bf16.mxu0 0
        %1322 = vmatpush1.bf16.msra.mxu0 0
        %1323 = vmatprep.mubr.bf16.mxu0 0
        %1324 = vmatmul.mubr.bf16.gmra.mrb[0].mxu0 %v864
        %v1325 = vpop.f32.mrb[0].mxu0
        %v1326 = vadd.f32 %v934, %v1325
        %v1327 = vpop.f32.mrb[0].mxu0
        %v1328 = vadd.f32 %v938, %v1327
        %v1329 = vpop.f32.mrb[0].mxu0
        %v1330 = vpop.f32.mrb[0].mxu0
        %1331 = vdwg.mxu0
        %1332 = vmatprep.subr.bf16.mxu0 %v1166
        %1333 = vmatpush1.bf16.msra.mxu0 %v1165
        %1334 = vmatprep.subr.bf16.mxu0 %v1174
        %1335 = vmatpush1.bf16.msra.mxu0 %v1173
        %1336 = vmatprep.subr.bf16.mxu0 %v1182
        %1337 = vmatpush1.bf16.msra.mxu0 %v1181
        %1338 = vmatprep.subr.bf16.mxu0 %v1190
        %1339 = vmatpush1.bf16.msra.mxu0 %v1189
        %1340 = vmatprep.subr.bf16.mxu0 %v1198
        %1341 = vmatpush1.bf16.msra.mxu0 %v1197
        %1342 = vmatprep.subr.bf16.mxu0 %v1206
        %1343 = vmatpush1.bf16.msra.mxu0 %v1205
        %1344 = vmatprep.subr.bf16.mxu0 %v1214
        %1345 = vmatpush1.bf16.msra.mxu0 %v1213
        %1346 = vmatprep.subr.bf16.mxu0 %v1222
        %1347 = vmatpush1.bf16.msra.mxu0 %v1221
        %1348 = vmatprep.subr.bf16.mxu0 0
        %1349 = vmatpush1.bf16.msra.mxu0 0
        %1350 = vmatprep.subr.bf16.mxu0 0
        %1351 = vmatpush1.bf16.msra.mxu0 0
        %1352 = vmatprep.subr.bf16.mxu0 0
        %1353 = vmatpush1.bf16.msra.mxu0 0
        %1354 = vmatprep.subr.bf16.mxu0 0
        %1355 = vmatpush1.bf16.msra.mxu0 0
        %1356 = vmatprep.subr.bf16.mxu0 0
        %1357 = vmatpush1.bf16.msra.mxu0 0
        %1358 = vmatprep.subr.bf16.mxu0 0
        %1359 = vmatpush1.bf16.msra.mxu0 0
        %1360 = vmatprep.subr.bf16.mxu0 0
        %1361 = vmatpush1.bf16.msra.mxu0 0
        %1362 = vmatprep.subr.bf16.mxu0 0
        %1363 = vmatpush1.bf16.msra.mxu0 0
        %1364 = vmatprep.mubr.bf16.mxu0 0
        %1365 = vmatmul.mubr.bf16.gmra.mrb[0].mxu0 %v864
        %v1366 = vpop.f32.mrb[0].mxu0
        %v1367 = vadd.f32 %v942, %v1366
        %v1368 = vpop.f32.mrb[0].mxu0
        %v1369 = vadd.f32 %v946, %v1368
        %v1370 = vpop.f32.mrb[0].mxu0
        %v1371 = vpop.f32.mrb[0].mxu0
        %1372 = vdwg.mxu0
        %1373 = vmatprep.subr.bf16.mxu0 %v1168
        %1374 = vmatpush1.bf16.msra.mxu0 %v1167
        %1375 = vmatprep.subr.bf16.mxu0 %v1176
        %1376 = vmatpush1.bf16.msra.mxu0 %v1175
        %1377 = vmatprep.subr.bf16.mxu0 %v1184
        %1378 = vmatpush1.bf16.msra.mxu0 %v1183
        %1379 = vmatprep.subr.bf16.mxu0 %v1192
        %1380 = vmatpush1.bf16.msra.mxu0 %v1191
        %1381 = vmatprep.subr.bf16.mxu0 %v1200
        %1382 = vmatpush1.bf16.msra.mxu0 %v1199
        %1383 = vmatprep.subr.bf16.mxu0 %v1208
        %1384 = vmatpush1.bf16.msra.mxu0 %v1207
        %1385 = vmatprep.subr.bf16.mxu0 %v1216
        %1386 = vmatpush1.bf16.msra.mxu0 %v1215
        %1387 = vmatprep.subr.bf16.mxu0 %v1224
        %1388 = vmatpush1.bf16.msra.mxu0 %v1223
        %1389 = vmatprep.subr.bf16.mxu0 0
        %1390 = vmatpush1.bf16.msra.mxu0 0
        %1391 = vmatprep.subr.bf16.mxu0 0
        %1392 = vmatpush1.bf16.msra.mxu0 0
        %1393 = vmatprep.subr.bf16.mxu0 0
        %1394 = vmatpush1.bf16.msra.mxu0 0
        %1395 = vmatprep.subr.bf16.mxu0 0
        %1396 = vmatpush1.bf16.msra.mxu0 0
        %1397 = vmatprep.subr.bf16.mxu0 0
        %1398 = vmatpush1.bf16.msra.mxu0 0
        %1399 = vmatprep.subr.bf16.mxu0 0
        %1400 = vmatpush1.bf16.msra.mxu0 0
        %1401 = vmatprep.subr.bf16.mxu0 0
        %1402 = vmatpush1.bf16.msra.mxu0 0
        %1403 = vmatprep.subr.bf16.mxu0 0
        %1404 = vmatpush1.bf16.msra.mxu0 0
        %1405 = vmatprep.mubr.bf16.mxu0 0
        %1406 = vmatmul.mubr.bf16.gmra.mrb[0].mxu0 %v864
        %v1407 = vpop.f32.mrb[0].mxu0
        %v1408 = vadd.f32 %v950, %v1407
        %v1409 = vpop.f32.mrb[0].mxu0
        %v1410 = vadd.f32 %v954, %v1409
        %v1411 = vpop.f32.mrb[0].mxu0
        %v1412 = vpop.f32.mrb[0].mxu0
        %1413 = vdwg.mxu0
        %1414 = vmatprep.subr.bf16.mxu0 %v1170
        %1415 = vmatpush1.bf16.msra.mxu0 %v1169
        %1416 = vmatprep.subr.bf16.mxu0 %v1178
        %1417 = vmatpush1.bf16.msra.mxu0 %v1177
        %1418 = vmatprep.subr.bf16.mxu0 %v1186
        %1419 = vmatpush1.bf16.msra.mxu0 %v1185
        %1420 = vmatprep.subr.bf16.mxu0 %v1194
        %1421 = vmatpush1.bf16.msra.mxu0 %v1193
        %1422 = vmatprep.subr.bf16.mxu0 %v1202
        %1423 = vmatpush1.bf16.msra.mxu0 %v1201
        %1424 = vmatprep.subr.bf16.mxu0 %v1210
        %1425 = vmatpush1.bf16.msra.mxu0 %v1209
        %1426 = vmatprep.subr.bf16.mxu0 %v1218
        %1427 = vmatpush1.bf16.msra.mxu0 %v1217
        %1428 = vmatprep.subr.bf16.mxu0 %v1226
        %1429 = vmatpush1.bf16.msra.mxu0 %v1225
        %1430 = vmatprep.subr.bf16.mxu0 0
        %1431 = vmatpush1.bf16.msra.mxu0 0
        %1432 = vmatprep.subr.bf16.mxu0 0
        %1433 = vmatpush1.bf16.msra.mxu0 0
        %1434 = vmatprep.subr.bf16.mxu0 0
        %1435 = vmatpush1.bf16.msra.mxu0 0
        %1436 = vmatprep.subr.bf16.mxu0 0
        %1437 = vmatpush1.bf16.msra.mxu0 0
        %1438 = vmatprep.subr.bf16.mxu0 0
        %1439 = vmatpush1.bf16.msra.mxu0 0
        %1440 = vmatprep.subr.bf16.mxu0 0
        %1441 = vmatpush1.bf16.msra.mxu0 0
        %1442 = vmatprep.subr.bf16.mxu0 0
        %1443 = vmatpush1.bf16.msra.mxu0 0
        %1444 = vmatprep.subr.bf16.mxu0 0
        %1445 = vmatpush1.bf16.msra.mxu0 0
        %1446 = vmatprep.mubr.bf16.mxu0 0
        %1447 = vmatmul.mubr.bf16.gmra.mrb[0].mxu0 %v864
        %v1448 = vpop.f32.mrb[0].mxu0
        %v1449 = vadd.f32 %v958, %v1448
        %v1450 = vpop.f32.mrb[0].mxu0
        %v1451 = vadd.f32 %v962, %v1450
        %v1452 = vpop.f32.mrb[0].mxu0
        %v1453 = vpop.f32.mrb[0].mxu0
        %1454 = vdwg.mxu0
        %v1455 = vmax.f32 %v1326, 0.0
        %v1456 = vmax.f32 %v1328, 0.0
        %v1457 = vmax.f32 %v1367, 0.0
        %v1458 = vmax.f32 %v1369, 0.0
        %v1459 = vmax.f32 %v1408, 0.0
        %v1460 = vmax.f32 %v1410, 0.0
        %v1461 = vmax.f32 %v1449, 0.0
        %v1462 = vmax.f32 %v1451, 0.0
        %v1463 = vpack.c.bf16 %v1455, %v1455
        %v1464 = vpack.c.bf16 %v1456, %v1456
        %v1465 = vpack.c.bf16 %v1457, %v1457
        %v1466 = vpack.c.bf16 %v1458, %v1458
        %v1467 = vpack.c.bf16 %v1459, %v1459
        %v1468 = vpack.c.bf16 %v1460, %v1460
        %v1469 = vpack.c.bf16 %v1461, %v1461
        %v1470 = vpack.c.bf16 %v1462, %v1462
        %v1471 = vld [vmem:[%s6] sm:$0xf]
        %v1472 = vld [vmem:[%s6 + $0x4] sm:$0xf]
        %v1473 = vld [vmem:[%s6 + $0x8] sm:$0xf]
        %v1474 = vld [vmem:[%s6 + $0xc] sm:$0xf]
        %v1475 = vld [vmem:[%s6 + $0x10] sm:$0xf]
        %v1476 = vld [vmem:[%s6 + $0x14] sm:$0xf]
        %v1477 = vld [vmem:[%s6 + $0x18] sm:$0xf]
        %v1478 = vld [vmem:[%s6 + $0x1c] sm:$0xf]
        %v1479 = vld [vmem:[%s6 + $0x20] sm:$0xf]
        %v1480 = vld [vmem:[%s6 + $0x24] sm:$0xf]
        %v1481 = vld [vmem:[%s6 + $0x28] sm:$0xf]
        %v1482 = vld [vmem:[%s6 + $0x2c] sm:$0xf]
        %v1483 = vld [vmem:[%s6 + $0x30] sm:$0xf]
        %v1484 = vld [vmem:[%s6 + $0x34] sm:$0xf]
        %v1485 = vld [vmem:[%s6 + $0x38] sm:$0xf]
        %v1486 = vld [vmem:[%s6 + $0x3c] sm:$0xf]
        %v1487 = vld [vmem:[%s6 + $0x40] sm:$0xf]
        %v1488 = vld [vmem:[%s6 + $0x44] sm:$0xf]
        %v1489 = vld [vmem:[%s6 + $0x48] sm:$0xf]
        %v1490 = vld [vmem:[%s6 + $0x4c] sm:$0xf]
        %v1491 = vld [vmem:[%s6 + $0x50] sm:$0xf]
        %v1492 = vld [vmem:[%s6 + $0x54] sm:$0xf]
        %v1493 = vld [vmem:[%s6 + $0x58] sm:$0xf]
        %v1494 = vld [vmem:[%s6 + $0x5c] sm:$0xf]
        %v1495 = vld [vmem:[%s6 + $0x60] sm:$0xf]
        %v1496 = vld [vmem:[%s6 + $0x64] sm:$0xf]
        %v1497 = vld [vmem:[%s6 + $0x68] sm:$0xf]
        %v1498 = vld [vmem:[%s6 + $0x6c] sm:$0xf]
        %v1499 = vld [vmem:[%s6 + $0x70] sm:$0xf]
        %v1500 = vld [vmem:[%s6 + $0x74] sm:$0xf]
        %v1501 = vld [vmem:[%s6 + $0x78] sm:$0xf]
        %v1502 = vld [vmem:[%s6 + $0x7c] sm:$0xf]
        %v1503 = vld [vmem:[%s6 + $0x80] sm:$0xf]
        %v1504 = vld [vmem:[%s6 + $0x84] sm:$0xf]
        %v1505 = vld [vmem:[%s6 + $0x88] sm:$0xf]
        %v1506 = vld [vmem:[%s6 + $0x8c] sm:$0xf]
        %v1507 = vld [vmem:[%s6 + $0x90] sm:$0xf]
        %v1508 = vld [vmem:[%s6 + $0x94] sm:$0xf]
        %v1509 = vld [vmem:[%s6 + $0x98] sm:$0xf]
        %v1510 = vld [vmem:[%s6 + $0x9c] sm:$0xf]
        %v1511 = vld [vmem:[%s6 + $0xa0] sm:$0xf]
        %v1512 = vld [vmem:[%s6 + $0xa4] sm:$0xf]
        %v1513 = vld [vmem:[%s6 + $0xa8] sm:$0xf]
        %v1514 = vld [vmem:[%s6 + $0xac] sm:$0xf]
        %v1515 = vld [vmem:[%s6 + $0xb0] sm:$0xf]
        %v1516 = vld [vmem:[%s6 + $0xb4] sm:$0xf]
        %v1517 = vld [vmem:[%s6 + $0xb8] sm:$0xf]
        %v1518 = vld [vmem:[%s6 + $0xbc] sm:$0xf]
        %v1519 = vld [vmem:[%s6 + $0xc0] sm:$0xf]
        %v1520 = vld [vmem:[%s6 + $0xc4] sm:$0xf]
        %v1521 = vld [vmem:[%s6 + $0xc8] sm:$0xf]
        %v1522 = vld [vmem:[%s6 + $0xcc] sm:$0xf]
        %v1523 = vld [vmem:[%s6 + $0xd0] sm:$0xf]
        %v1524 = vld [vmem:[%s6 + $0xd4] sm:$0xf]
        %v1525 = vld [vmem:[%s6 + $0xd8] sm:$0xf]
        %v1526 = vld [vmem:[%s6 + $0xdc] sm:$0xf]
        %v1527 = vld [vmem:[%s6 + $0xe0] sm:$0xf]
        %v1528 = vld [vmem:[%s6 + $0xe4] sm:$0xf]
        %v1529 = vld [vmem:[%s6 + $0xe8] sm:$0xf]
        %v1530 = vld [vmem:[%s6 + $0xec] sm:$0xf]
        %v1531 = vld [vmem:[%s6 + $0xf0] sm:$0xf]
        %v1532 = vld [vmem:[%s6 + $0xf4] sm:$0xf]
        %v1533 = vld [vmem:[%s6 + $0xf8] sm:$0xf]
        %v1534 = vld [vmem:[%s6 + $0xfc] sm:$0xf]
        %v1535 = vld [vmem:[%s6 + $0x100] sm:$0xf]
        %v1536 = vld [vmem:[%s6 + $0x104] sm:$0xf]
        %v1537 = vld [vmem:[%s6 + $0x108] sm:$0xf]
        %v1538 = vld [vmem:[%s6 + $0x10c] sm:$0xf]
        %v1539 = vld [vmem:[%s6 + $0x110] sm:$0xf]
        %v1540 = vld [vmem:[%s6 + $0x114] sm:$0xf]
        %v1541 = vld [vmem:[%s6 + $0x118] sm:$0xf]
        %v1542 = vld [vmem:[%s6 + $0x11c] sm:$0xf]
        %v1543 = vld [vmem:[%s6 + $0x120] sm:$0xf]
        %v1544 = vld [vmem:[%s6 + $0x124] sm:$0xf]
        %v1545 = vld [vmem:[%s6 + $0x128] sm:$0xf]
        %v1546 = vld [vmem:[%s6 + $0x12c] sm:$0xf]
        %v1547 = vld [vmem:[%s6 + $0x130] sm:$0xf]
        %v1548 = vld [vmem:[%s6 + $0x134] sm:$0xf]
        %v1549 = vld [vmem:[%s6 + $0x138] sm:$0xf]
        %v1550 = vld [vmem:[%s6 + $0x13c] sm:$0xf]
        %v1551 = vld [vmem:[%s6 + $0x140] sm:$0xf]
        %v1552 = vld [vmem:[%s6 + $0x144] sm:$0xf]
        %v1553 = vld [vmem:[%s6 + $0x148] sm:$0xf]
        %v1554 = vld [vmem:[%s6 + $0x14c] sm:$0xf]
        %v1555 = vld [vmem:[%s6 + $0x150] sm:$0xf]
        %v1556 = vld [vmem:[%s6 + $0x154] sm:$0xf]
        %v1557 = vld [vmem:[%s6 + $0x158] sm:$0xf]
        %v1558 = vld [vmem:[%s6 + $0x15c] sm:$0xf]
        %v1559 = vld [vmem:[%s6 + $0x160] sm:$0xf]
        %v1560 = vld [vmem:[%s6 + $0x164] sm:$0xf]
        %v1561 = vld [vmem:[%s6 + $0x168] sm:$0xf]
        %v1562 = vld [vmem:[%s6 + $0x16c] sm:$0xf]
        %v1563 = vld [vmem:[%s6 + $0x170] sm:$0xf]
        %v1564 = vld [vmem:[%s6 + $0x174] sm:$0xf]
        %v1565 = vld [vmem:[%s6 + $0x178] sm:$0xf]
        %v1566 = vld [vmem:[%s6 + $0x17c] sm:$0xf]
        %v1567 = vld [vmem:[%s6 + $0x180] sm:$0xf]
        %v1568 = vld [vmem:[%s6 + $0x184] sm:$0xf]
        %v1569 = vld [vmem:[%s6 + $0x188] sm:$0xf]
        %v1570 = vld [vmem:[%s6 + $0x18c] sm:$0xf]
        %v1571 = vld [vmem:[%s6 + $0x190] sm:$0xf]
        %v1572 = vld [vmem:[%s6 + $0x194] sm:$0xf]
        %v1573 = vld [vmem:[%s6 + $0x198] sm:$0xf]
        %v1574 = vld [vmem:[%s6 + $0x19c] sm:$0xf]
        %v1575 = vld [vmem:[%s6 + $0x1a0] sm:$0xf]
        %v1576 = vld [vmem:[%s6 + $0x1a4] sm:$0xf]
        %v1577 = vld [vmem:[%s6 + $0x1a8] sm:$0xf]
        %v1578 = vld [vmem:[%s6 + $0x1ac] sm:$0xf]
        %v1579 = vld [vmem:[%s6 + $0x1b0] sm:$0xf]
        %v1580 = vld [vmem:[%s6 + $0x1b4] sm:$0xf]
        %v1581 = vld [vmem:[%s6 + $0x1b8] sm:$0xf]
        %v1582 = vld [vmem:[%s6 + $0x1bc] sm:$0xf]
        %v1583 = vld [vmem:[%s6 + $0x1c0] sm:$0xf]
        %v1584 = vld [vmem:[%s6 + $0x1c4] sm:$0xf]
        %v1585 = vld [vmem:[%s6 + $0x1c8] sm:$0xf]
        %v1586 = vld [vmem:[%s6 + $0x1cc] sm:$0xf]
        %v1587 = vld [vmem:[%s6 + $0x1d0] sm:$0xf]
        %v1588 = vld [vmem:[%s6 + $0x1d4] sm:$0xf]
        %v1589 = vld [vmem:[%s6 + $0x1d8] sm:$0xf]
        %v1590 = vld [vmem:[%s6 + $0x1dc] sm:$0xf]
        %v1591 = vld [vmem:[%s6 + $0x1e0] sm:$0xf]
        %v1592 = vld [vmem:[%s6 + $0x1e4] sm:$0xf]
        %v1593 = vld [vmem:[%s6 + $0x1e8] sm:$0xf]
        %v1594 = vld [vmem:[%s6 + $0x1ec] sm:$0xf]
        %v1595 = vld [vmem:[%s6 + $0x1f0] sm:$0xf]
        %v1596 = vld [vmem:[%s6 + $0x1f4] sm:$0xf]
        %v1597 = vld [vmem:[%s6 + $0x1f8] sm:$0xf]
        %v1598 = vld [vmem:[%s6 + $0x1fc] sm:$0xf]
        %v1599 = vld [vmem:[%s7] sm:$0x1]
        %v1601 = vlaneseq
        %v1602 = vshrl.u32 %v1601, 7
        %v1603 = vsub.s32 0, %v1602
        %v1604 = vrot.slane %v1599, %v1603
        %v1734 = vunpack.c.l.b16 %v1471
        %v1735 = vunpack.c.l.b16 %v1472
        %v1736 = vunpack.c.l.b16 %v1473
        %v1737 = vunpack.c.l.b16 %v1474
        %v1738 = vunpack.c.l.b16 %v1475
        %v1739 = vunpack.c.l.b16 %v1476
        %v1740 = vunpack.c.l.b16 %v1477
        %v1741 = vunpack.c.l.b16 %v1478
        %v1742 = vunpack.c.l.b16 %v1479
        %v1743 = vunpack.c.l.b16 %v1480
        %v1744 = vunpack.c.l.b16 %v1481
        %v1745 = vunpack.c.l.b16 %v1482
        %v1746 = vunpack.c.l.b16 %v1483
        %v1747 = vunpack.c.l.b16 %v1484
        %v1748 = vunpack.c.l.b16 %v1485
        %v1749 = vunpack.c.l.b16 %v1486
        %v1750 = vunpack.c.l.b16 %v1487
        %v1751 = vunpack.c.l.b16 %v1488
        %v1752 = vunpack.c.l.b16 %v1489
        %v1753 = vunpack.c.l.b16 %v1490
        %v1754 = vunpack.c.l.b16 %v1491
        %v1755 = vunpack.c.l.b16 %v1492
        %v1756 = vunpack.c.l.b16 %v1493
        %v1757 = vunpack.c.l.b16 %v1494
        %v1758 = vunpack.c.l.b16 %v1495
        %v1759 = vunpack.c.l.b16 %v1496
        %v1760 = vunpack.c.l.b16 %v1497
        %v1761 = vunpack.c.l.b16 %v1498
        %v1762 = vunpack.c.l.b16 %v1499
        %v1763 = vunpack.c.l.b16 %v1500
        %v1764 = vunpack.c.l.b16 %v1501
        %v1765 = vunpack.c.l.b16 %v1502
        %v1766 = vunpack.c.l.b16 %v1503
        %v1767 = vunpack.c.l.b16 %v1504
        %v1768 = vunpack.c.l.b16 %v1505
        %v1769 = vunpack.c.l.b16 %v1506
        %v1770 = vunpack.c.l.b16 %v1507
        %v1771 = vunpack.c.l.b16 %v1508
        %v1772 = vunpack.c.l.b16 %v1509
        %v1773 = vunpack.c.l.b16 %v1510
        %v1774 = vunpack.c.l.b16 %v1511
        %v1775 = vunpack.c.l.b16 %v1512
        %v1776 = vunpack.c.l.b16 %v1513
        %v1777 = vunpack.c.l.b16 %v1514
        %v1778 = vunpack.c.l.b16 %v1515
        %v1779 = vunpack.c.l.b16 %v1516
        %v1780 = vunpack.c.l.b16 %v1517
        %v1781 = vunpack.c.l.b16 %v1518
        %v1782 = vunpack.c.l.b16 %v1519
        %v1783 = vunpack.c.l.b16 %v1520
        %v1784 = vunpack.c.l.b16 %v1521
        %v1785 = vunpack.c.l.b16 %v1522
        %v1786 = vunpack.c.l.b16 %v1523
        %v1787 = vunpack.c.l.b16 %v1524
        %v1788 = vunpack.c.l.b16 %v1525
        %v1789 = vunpack.c.l.b16 %v1526
        %v1790 = vunpack.c.l.b16 %v1527
        %v1791 = vunpack.c.l.b16 %v1528
        %v1792 = vunpack.c.l.b16 %v1529
        %v1793 = vunpack.c.l.b16 %v1530
        %v1794 = vunpack.c.l.b16 %v1531
        %v1795 = vunpack.c.l.b16 %v1532
        %v1796 = vunpack.c.l.b16 %v1533
        %v1797 = vunpack.c.l.b16 %v1534
        %v1798 = vunpack.c.l.b16 %v1535
        %v1799 = vunpack.c.l.b16 %v1536
        %v1800 = vunpack.c.l.b16 %v1537
        %v1801 = vunpack.c.l.b16 %v1538
        %v1802 = vunpack.c.l.b16 %v1539
        %v1803 = vunpack.c.l.b16 %v1540
        %v1804 = vunpack.c.l.b16 %v1541
        %v1805 = vunpack.c.l.b16 %v1542
        %v1806 = vunpack.c.l.b16 %v1543
        %v1807 = vunpack.c.l.b16 %v1544
        %v1808 = vunpack.c.l.b16 %v1545
        %v1809 = vunpack.c.l.b16 %v1546
        %v1810 = vunpack.c.l.b16 %v1547
        %v1811 = vunpack.c.l.b16 %v1548
        %v1812 = vunpack.c.l.b16 %v1549
        %v1813 = vunpack.c.l.b16 %v1550
        %v1814 = vunpack.c.l.b16 %v1551
        %v1815 = vunpack.c.l.b16 %v1552
        %v1816 = vunpack.c.l.b16 %v1553
        %v1817 = vunpack.c.l.b16 %v1554
        %v1818 = vunpack.c.l.b16 %v1555
        %v1819 = vunpack.c.l.b16 %v1556
        %v1820 = vunpack.c.l.b16 %v1557
        %v1821 = vunpack.c.l.b16 %v1558
        %v1822 = vunpack.c.l.b16 %v1559
        %v1823 = vunpack.c.l.b16 %v1560
        %v1824 = vunpack.c.l.b16 %v1561
        %v1825 = vunpack.c.l.b16 %v1562
        %v1826 = vunpack.c.l.b16 %v1563
        %v1827 = vunpack.c.l.b16 %v1564
        %v1828 = vunpack.c.l.b16 %v1565
        %v1829 = vunpack.c.l.b16 %v1566
        %v1830 = vunpack.c.l.b16 %v1567
        %v1831 = vunpack.c.l.b16 %v1568
        %v1832 = vunpack.c.l.b16 %v1569
        %v1833 = vunpack.c.l.b16 %v1570
        %v1834 = vunpack.c.l.b16 %v1571
        %v1835 = vunpack.c.l.b16 %v1572
        %v1836 = vunpack.c.l.b16 %v1573
        %v1837 = vunpack.c.l.b16 %v1574
        %v1838 = vunpack.c.l.b16 %v1575
        %v1839 = vunpack.c.l.b16 %v1576
        %v1840 = vunpack.c.l.b16 %v1577
        %v1841 = vunpack.c.l.b16 %v1578
        %v1842 = vunpack.c.l.b16 %v1579
        %v1843 = vunpack.c.l.b16 %v1580
        %v1844 = vunpack.c.l.b16 %v1581
        %v1845 = vunpack.c.l.b16 %v1582
        %v1846 = vunpack.c.l.b16 %v1583
        %v1847 = vunpack.c.l.b16 %v1584
        %v1848 = vunpack.c.l.b16 %v1585
        %v1849 = vunpack.c.l.b16 %v1586
        %v1850 = vunpack.c.l.b16 %v1587
        %v1851 = vunpack.c.l.b16 %v1588
        %v1852 = vunpack.c.l.b16 %v1589
        %v1853 = vunpack.c.l.b16 %v1590
        %v1854 = vunpack.c.l.b16 %v1591
        %v1855 = vunpack.c.l.b16 %v1592
        %v1856 = vunpack.c.l.b16 %v1593
        %v1857 = vunpack.c.l.b16 %v1594
        %v1858 = vunpack.c.l.b16 %v1595
        %v1859 = vunpack.c.l.b16 %v1596
        %v1860 = vunpack.c.l.b16 %v1597
        %v1861 = vunpack.c.l.b16 %v1598
        %v1862 = vpack.c.b16 %v1735, %v1734
        %v1863 = vpack.c.b16 %v1737, %v1736
        %v1864 = vpack.c.b16 %v1739, %v1738
        %v1865 = vpack.c.b16 %v1741, %v1740
        %v1866 = vpack.c.b16 %v1743, %v1742
        %v1867 = vpack.c.b16 %v1745, %v1744
        %v1868 = vpack.c.b16 %v1747, %v1746
        %v1869 = vpack.c.b16 %v1749, %v1748
        %v1870 = vpack.c.b16 %v1751, %v1750
        %v1871 = vpack.c.b16 %v1753, %v1752
        %v1872 = vpack.c.b16 %v1755, %v1754
        %v1873 = vpack.c.b16 %v1757, %v1756
        %v1874 = vpack.c.b16 %v1759, %v1758
        %v1875 = vpack.c.b16 %v1761, %v1760
        %v1876 = vpack.c.b16 %v1763, %v1762
        %v1877 = vpack.c.b16 %v1765, %v1764
        %v1878 = vpack.c.b16 %v1767, %v1766
        %v1879 = vpack.c.b16 %v1769, %v1768
        %v1880 = vpack.c.b16 %v1771, %v1770
        %v1881 = vpack.c.b16 %v1773, %v1772
        %v1882 = vpack.c.b16 %v1775, %v1774
        %v1883 = vpack.c.b16 %v1777, %v1776
        %v1884 = vpack.c.b16 %v1779, %v1778
        %v1885 = vpack.c.b16 %v1781, %v1780
        %v1886 = vpack.c.b16 %v1783, %v1782
        %v1887 = vpack.c.b16 %v1785, %v1784
        %v1888 = vpack.c.b16 %v1787, %v1786
        %v1889 = vpack.c.b16 %v1789, %v1788
        %v1890 = vpack.c.b16 %v1791, %v1790
        %v1891 = vpack.c.b16 %v1793, %v1792
        %v1892 = vpack.c.b16 %v1795, %v1794
        %v1893 = vpack.c.b16 %v1797, %v1796
        %v1894 = vpack.c.b16 %v1799, %v1798
        %v1895 = vpack.c.b16 %v1801, %v1800
        %v1896 = vpack.c.b16 %v1803, %v1802
        %v1897 = vpack.c.b16 %v1805, %v1804
        %v1898 = vpack.c.b16 %v1807, %v1806
        %v1899 = vpack.c.b16 %v1809, %v1808
        %v1900 = vpack.c.b16 %v1811, %v1810
        %v1901 = vpack.c.b16 %v1813, %v1812
        %v1902 = vpack.c.b16 %v1815, %v1814
        %v1903 = vpack.c.b16 %v1817, %v1816
        %v1904 = vpack.c.b16 %v1819, %v1818
        %v1905 = vpack.c.b16 %v1821, %v1820
        %v1906 = vpack.c.b16 %v1823, %v1822
        %v1907 = vpack.c.b16 %v1825, %v1824
        %v1908 = vpack.c.b16 %v1827, %v1826
        %v1909 = vpack.c.b16 %v1829, %v1828
        %v1910 = vpack.c.b16 %v1831, %v1830
        %v1911 = vpack.c.b16 %v1833, %v1832
        %v1912 = vpack.c.b16 %v1835, %v1834
        %v1913 = vpack.c.b16 %v1837, %v1836
        %v1914 = vpack.c.b16 %v1839, %v1838
        %v1915 = vpack.c.b16 %v1841, %v1840
        %v1916 = vpack.c.b16 %v1843, %v1842
        %v1917 = vpack.c.b16 %v1845, %v1844
        %v1918 = vpack.c.b16 %v1847, %v1846
        %v1919 = vpack.c.b16 %v1849, %v1848
        %v1920 = vpack.c.b16 %v1851, %v1850
        %v1921 = vpack.c.b16 %v1853, %v1852
        %v1922 = vpack.c.b16 %v1855, %v1854
        %v1923 = vpack.c.b16 %v1857, %v1856
        %v1924 = vpack.c.b16 %v1859, %v1858
        %v1925 = vpack.c.b16 %v1861, %v1860
        %1990 = vmatprep.subr.bf16.mxu0 0
        %1991 = vmatpush1.bf16.msra.mxu0 %v1862
        %1992 = vmatprep.subr.bf16.mxu0 0
        %1993 = vmatpush1.bf16.msra.mxu0 %v1863
        %1994 = vmatprep.subr.bf16.mxu0 0
        %1995 = vmatpush1.bf16.msra.mxu0 %v1864
        %1996 = vmatprep.subr.bf16.mxu0 0
        %1997 = vmatpush1.bf16.msra.mxu0 %v1865
        %1998 = vmatprep.subr.bf16.mxu0 0
        %1999 = vmatpush1.bf16.msra.mxu0 %v1866
        %2000 = vmatprep.subr.bf16.mxu0 0
        %2001 = vmatpush1.bf16.msra.mxu0 %v1867
        %2002 = vmatprep.subr.bf16.mxu0 0
        %2003 = vmatpush1.bf16.msra.mxu0 %v1868
        %2004 = vmatprep.subr.bf16.mxu0 0
        %2005 = vmatpush1.bf16.msra.mxu0 %v1869
        %2006 = vmatprep.subr.bf16.mxu0 0
        %2007 = vmatpush1.bf16.msra.mxu0 %v1870
        %2008 = vmatprep.subr.bf16.mxu0 0
        %2009 = vmatpush1.bf16.msra.mxu0 %v1871
        %2010 = vmatprep.subr.bf16.mxu0 0
        %2011 = vmatpush1.bf16.msra.mxu0 %v1872
        %2012 = vmatprep.subr.bf16.mxu0 0
        %2013 = vmatpush1.bf16.msra.mxu0 %v1873
        %2014 = vmatprep.subr.bf16.mxu0 0
        %2015 = vmatpush1.bf16.msra.mxu0 %v1874
        %2016 = vmatprep.subr.bf16.mxu0 0
        %2017 = vmatpush1.bf16.msra.mxu0 %v1875
        %2018 = vmatprep.subr.bf16.mxu0 0
        %2019 = vmatpush1.bf16.msra.mxu0 %v1876
        %2020 = vmatprep.subr.bf16.mxu0 0
        %2021 = vmatpush1.bf16.msra.mxu0 %v1877
        %2022 = vmatprep.mubr.bf16.mxu0 %v1464
        %2023 = vmatmul.mubr.bf16.gmra.mrb[0].mxu0 %v1463
        %v2024 = vpop.f32.mrb[0].mxu0
        %v2025 = vadd.f32 %v1604, %v2024
        %v2026 = vpop.f32.mrb[0].mxu0
        %v2027 = vpop.f32.mrb[0].mxu0
        %v2028 = vpop.f32.mrb[0].mxu0
        %2029 = vdwg.mxu0
        %2030 = vmatprep.subr.bf16.mxu0 0
        %2031 = vmatpush1.bf16.msra.mxu0 %v1878
        %2032 = vmatprep.subr.bf16.mxu0 0
        %2033 = vmatpush1.bf16.msra.mxu0 %v1879
        %2034 = vmatprep.subr.bf16.mxu0 0
        %2035 = vmatpush1.bf16.msra.mxu0 %v1880
        %2036 = vmatprep.subr.bf16.mxu0 0
        %2037 = vmatpush1.bf16.msra.mxu0 %v1881
        %2038 = vmatprep.subr.bf16.mxu0 0
        %2039 = vmatpush1.bf16.msra.mxu0 %v1882
        %2040 = vmatprep.subr.bf16.mxu0 0
        %2041 = vmatpush1.bf16.msra.mxu0 %v1883
        %2042 = vmatprep.subr.bf16.mxu0 0
        %2043 = vmatpush1.bf16.msra.mxu0 %v1884
        %2044 = vmatprep.subr.bf16.mxu0 0
        %2045 = vmatpush1.bf16.msra.mxu0 %v1885
        %2046 = vmatprep.subr.bf16.mxu0 0
        %2047 = vmatpush1.bf16.msra.mxu0 %v1886
        %2048 = vmatprep.subr.bf16.mxu0 0
        %2049 = vmatpush1.bf16.msra.mxu0 %v1887
        %2050 = vmatprep.subr.bf16.mxu0 0
        %2051 = vmatpush1.bf16.msra.mxu0 %v1888
        %2052 = vmatprep.subr.bf16.mxu0 0
        %2053 = vmatpush1.bf16.msra.mxu0 %v1889
        %2054 = vmatprep.subr.bf16.mxu0 0
        %2055 = vmatpush1.bf16.msra.mxu0 %v1890
        %2056 = vmatprep.subr.bf16.mxu0 0
        %2057 = vmatpush1.bf16.msra.mxu0 %v1891
        %2058 = vmatprep.subr.bf16.mxu0 0
        %2059 = vmatpush1.bf16.msra.mxu0 %v1892
        %2060 = vmatprep.subr.bf16.mxu0 0
        %2061 = vmatpush1.bf16.msra.mxu0 %v1893
        %2062 = vmatprep.mubr.bf16.mxu0 %v1466
        %2063 = vmatmul.mubr.bf16.gmra.mrb[0].mxu0 %v1465
        %v2064 = vpop.f32.mrb[0].mxu0
        %v2065 = vadd.f32 %v2025, %v2064
        %v2066 = vpop.f32.mrb[0].mxu0
        %v2067 = vpop.f32.mrb[0].mxu0
        %v2068 = vpop.f32.mrb[0].mxu0
        %2069 = vdwg.mxu0
        %2070 = vmatprep.subr.bf16.mxu0 0
        %2071 = vmatpush1.bf16.msra.mxu0 %v1894
        %2072 = vmatprep.subr.bf16.mxu0 0
        %2073 = vmatpush1.bf16.msra.mxu0 %v1895
        %2074 = vmatprep.subr.bf16.mxu0 0
        %2075 = vmatpush1.bf16.msra.mxu0 %v1896
        %2076 = vmatprep.subr.bf16.mxu0 0
        %2077 = vmatpush1.bf16.msra.mxu0 %v1897
        %2078 = vmatprep.subr.bf16.mxu0 0
        %2079 = vmatpush1.bf16.msra.mxu0 %v1898
        %2080 = vmatprep.subr.bf16.mxu0 0
        %2081 = vmatpush1.bf16.msra.mxu0 %v1899
        %2082 = vmatprep.subr.bf16.mxu0 0
        %2083 = vmatpush1.bf16.msra.mxu0 %v1900
        %2084 = vmatprep.subr.bf16.mxu0 0
        %2085 = vmatpush1.bf16.msra.mxu0 %v1901
        %2086 = vmatprep.subr.bf16.mxu0 0
        %2087 = vmatpush1.bf16.msra.mxu0 %v1902
        %2088 = vmatprep.subr.bf16.mxu0 0
        %2089 = vmatpush1.bf16.msra.mxu0 %v1903
        %2090 = vmatprep.subr.bf16.mxu0 0
        %2091 = vmatpush1.bf16.msra.mxu0 %v1904
        %2092 = vmatprep.subr.bf16.mxu0 0
        %2093 = vmatpush1.bf16.msra.mxu0 %v1905
        %2094 = vmatprep.subr.bf16.mxu0 0
        %2095 = vmatpush1.bf16.msra.mxu0 %v1906
        %2096 = vmatprep.subr.bf16.mxu0 0
        %2097 = vmatpush1.bf16.msra.mxu0 %v1907
        %2098 = vmatprep.subr.bf16.mxu0 0
        %2099 = vmatpush1.bf16.msra.mxu0 %v1908
        %2100 = vmatprep.subr.bf16.mxu0 0
        %2101 = vmatpush1.bf16.msra.mxu0 %v1909
        %2102 = vmatprep.mubr.bf16.mxu0 %v1468
        %2103 = vmatmul.mubr.bf16.gmra.mrb[0].mxu0 %v1467
        %v2104 = vpop.f32.mrb[0].mxu0
        %v2105 = vadd.f32 %v2065, %v2104
        %v2106 = vpop.f32.mrb[0].mxu0
        %v2107 = vpop.f32.mrb[0].mxu0
        %v2108 = vpop.f32.mrb[0].mxu0
        %2109 = vdwg.mxu0
        %2110 = vmatprep.subr.bf16.mxu0 0
        %2111 = vmatpush1.bf16.msra.mxu0 %v1910
        %2112 = vmatprep.subr.bf16.mxu0 0
        %2113 = vmatpush1.bf16.msra.mxu0 %v1911
        %2114 = vmatprep.subr.bf16.mxu0 0
        %2115 = vmatpush1.bf16.msra.mxu0 %v1912
        %2116 = vmatprep.subr.bf16.mxu0 0
        %2117 = vmatpush1.bf16.msra.mxu0 %v1913
        %2118 = vmatprep.subr.bf16.mxu0 0
        %2119 = vmatpush1.bf16.msra.mxu0 %v1914
        %2120 = vmatprep.subr.bf16.mxu0 0
        %2121 = vmatpush1.bf16.msra.mxu0 %v1915
        %2122 = vmatprep.subr.bf16.mxu0 0
        %2123 = vmatpush1.bf16.msra.mxu0 %v1916
        %2124 = vmatprep.subr.bf16.mxu0 0
        %2125 = vmatpush1.bf16.msra.mxu0 %v1917
        %2126 = vmatprep.subr.bf16.mxu0 0
        %2127 = vmatpush1.bf16.msra.mxu0 %v1918
        %2128 = vmatprep.subr.bf16.mxu0 0
        %2129 = vmatpush1.bf16.msra.mxu0 %v1919
        %2130 = vmatprep.subr.bf16.mxu0 0
        %2131 = vmatpush1.bf16.msra.mxu0 %v1920
        %2132 = vmatprep.subr.bf16.mxu0 0
        %2133 = vmatpush1.bf16.msra.mxu0 %v1921
        %2134 = vmatprep.subr.bf16.mxu0 0
        %2135 = vmatpush1.bf16.msra.mxu0 %v1922
        %2136 = vmatprep.subr.bf16.mxu0 0
        %2137 = vmatpush1.bf16.msra.mxu0 %v1923
        %2138 = vmatprep.subr.bf16.mxu0 0
        %2139 = vmatpush1.bf16.msra.mxu0 %v1924
        %2140 = vmatprep.subr.bf16.mxu0 0
        %2141 = vmatpush1.bf16.msra.mxu0 %v1925
        %2142 = vmatprep.mubr.bf16.mxu0 %v1470
        %2143 = vmatmul.mubr.bf16.gmra.mrb[0].mxu0 %v1469
        %v2144 = vpop.f32.mrb[0].mxu0
        %v2145 = vadd.f32 %v2105, %v2144
        %v2146 = vpop.f32.mrb[0].mxu0
        %v2147 = vpop.f32.mrb[0].mxu0
        %v2148 = vpop.f32.mrb[0].mxu0
        %2149 = vdwg.mxu0
        %2150 = vmax.xlane.f32.xlu0 %v2145
        %v2151 = vpop.xlane.xlu0 %2150
        %v2152 = vsub.f32 %v2145, %v2151
        %v2153 = vmul.f32 %v2152, 1.442695
        %v2154 = vpow.pop %v2153
        %2155 = vadd.xlane.f32.xlu0 %v2154
        %v2156 = vpop.xlane.xlu0 %2155
        %v2157 = vrcp.pop %v2156
        %v2158 = vmul.f32 %v2154, %v2157
        %2159 = vst [vmem:[%s344] sm:$0xff] %v2158
      $region60: #{cnn_forward.1} parent=51 // pred_fallthru
        _
      %p2160 = scmp.lt.s32.totalorder %s23, 1
      %s2161 = scalar_select %p2160, %s23, 1
      %s2162 = smul.addr %s2161, 8
      %s2163 = scalar_lea.vmem %s8, %s2162
      // Predicated region
      $region61: #{cnn_forward.1} parent=51 // pred_check
        %p2164 = pneg %p229
      $region62: #{cnn_forward.1} parent=51 // pred_check_branch
        %2166 = sbr.rel (%p2164) target = $region64
      $region63: #{cnn_forward.1} parent=51 // pred_region
        _
      $region64: #{cnn_forward.1} parent=51 // pred_fallthru
        _
    $region52: #{cnn_forward.1} parent=5 // pred_fallthru
      _
    %p2167 = scmp.le.s32.totalorder 2, %s14
    // Predicated region
    $region65: #{cnn_forward.1} parent=5 // pred_check
      %p2168 = pneg %p2167
    $region66: #{cnn_forward.1} parent=5 // pred_check_branch
      %2170 = sbr.rel (%p2168) target = $region68
    $region67: #{cnn_forward.1} parent=5 // pred_region
      %s2171 = ssub.s32 %s14, 2
      // Predicated region
      $region69: #{cnn_forward.1} parent=67 // pred_check
        %p2172 = pneg %p235
      $region70: #{cnn_forward.1} parent=67 // pred_check_branch
        %2174 = sbr.rel (%p2172) target = $region72
      $region71: #{cnn_forward.1} parent=67 // pred_region
        %p2175 = scmp.lt.s32.totalorder %s25, 1
        %s2176 = scalar_select %p2175, %s25, 1
        %s2177 = smul.addr %s2176, 8
        %s2178 = scalar_lea.vmem %s8, %s2177
      $region72: #{cnn_forward.1} parent=67 // pred_fallthru
        _
    $region68: #{cnn_forward.1} parent=5 // pred_fallthru
      _
  $region6: #{cnn_forward.1} parent=0 // loop_footer
    %s18 = sadd.s32 1, %s14
  $region7: #{cnn_forward.1} parent=0 // loop_footer_branch
    %13 = sbr.rel target = $region3
  $region8: #{cnn_forward.1} parent=0 // loop_exit
    _

</llo_original>
